<compile_context>
chip_gen: v7x
topology: tpu7x:2x2x1
jax: 0.10.0
libtpu: 0.0.40
codegen_flags: <defaults>
</compile_context>

<pallas_src>
import functools

import jax
import jax.numpy as jnp
from jax.experimental import pallas as pl
from jax.experimental.pallas import tpu as pltpu


def _leaky_relu(x, slope=0.01):          # torch nn.LeakyReLU default slope
    return jnp.where(x > 0, x, slope * x)


def _gelu(x):                            # torch nn.GELU default = exact (erf) gelu
    return 0.5 * x * (1.0 + jax.lax.erf(x * (2.0 ** -0.5)))


def _round_up(x, m):
    return (x + m - 1) // m * m


def _pack_weight_slab(mats):
    """Pack (out, in) channel-major operator matrices into ONE bf16 slab.

    Each block is padded to a multiple of 16 rows (bf16 sublane tile) so every
    in-kernel row slice is tile aligned; width is a shared lane-padded value.
    Returns (slab bf16 (R, W), {name: (row_off, nrows, ncols)}).
    """
    width = _round_up(max(int(w.shape[1]) for _, w in mats), 128)
    blocks, offs, r = [], {}, 0
    for name, w in mats:
        w = jnp.asarray(w, jnp.float32)
        nr, nc = int(w.shape[0]), int(w.shape[1])
        nr_pad = _round_up(nr, 16)
        blk = jnp.zeros((nr_pad, width), jnp.float32).at[:nr, :nc].set(w)
        blocks.append(blk)
        offs[name] = (r, nr, nc)
        r += nr_pad
    return jnp.concatenate(blocks, axis=0).astype(jnp.bfloat16), offs


def _pack_bias_slab(vecs):
    """Pack bias vectors as f32 column vectors into one (R, 1) slab."""
    blocks, offs, r = [], {}, 0
    for name, b in vecs:
        b = jnp.asarray(b, jnp.float32).reshape(-1)
        n = int(b.shape[0])
        n_pad = _round_up(n, 8)
        blk = jnp.zeros((n_pad, 1), jnp.float32).at[:n, 0].set(b)
        blocks.append(blk)
        offs[name] = (r, n)
        r += n_pad
    return jnp.concatenate(blocks, axis=0), offs


def _fuse_and_pack(params, heads, q_dim, v_dim, out_dim):
    """Offline linear folding + slab packing (channel-major operators, (out, in)).

    Folds: proj_q_c -> proj_q_l.Linear1 (per head);  proj_q_l.Linear2 as a
    block diagonal over heads;  proj_k/proj_v into one fused MLP (row-concat
    first Linears + block-diag second Linears);  proj_out -> final_out.Linear1
    (per head, pure linear composition).
    """
    f32 = jnp.float32
    D = out_dim
    g = lambda n: jnp.asarray(params[n], f32)
    vec = lambda n: jnp.asarray(params[n], f32).reshape(-1)

    wc, bc = g("wc"), vec("bc")
    w1q, b1q = g("w1q"), vec("b1q")
    w2q, b2q = g("w2q"), vec("b2q")
    w1k, b1k = g("w1k"), vec("b1k")
    w2k, b2k = g("w2k"), vec("b2k")
    w1v, b1v = g("w1v"), vec("b1v")
    w2v, b2v = g("w2v"), vec("b2v")
    wo, bo = g("wo"), vec("bo")
    wf1, bf1 = g("wf1"), vec("bf1")
    wf2, bf2 = g("wf2"), vec("bf2")

    assert wc.shape == (q_dim, heads * q_dim)         # columns head-major
    assert wf1.shape == (heads * D, D)                # rows head-major

    # --- proj_q_c folded into proj_q_l Linear1 (per head), stacked head-major ---
    wq1_blocks, bq1_blocks = [], []
    for h in range(heads):
        wc_h = wc[:, h * q_dim:(h + 1) * q_dim]       # (q_dim, q_dim), in -> out
        bc_h = bc[h * q_dim:(h + 1) * q_dim]
        wq1_blocks.append((wc_h @ w1q).T)             # (q_dim, q_dim) operator
        bq1_blocks.append(w1q.T @ bc_h + b1q)
    Wq1 = jnp.concatenate(wq1_blocks, axis=0)         # (heads*q_dim, q_dim)
    bq1 = jnp.concatenate(bq1_blocks, axis=0)

    # --- proj_q_l Linear2 (head shared) as a block diagonal over heads ---
    Wq2 = jnp.zeros((heads * D, heads * q_dim), f32)
    for h in range(heads):
        Wq2 = Wq2.at[h * D:(h + 1) * D, h * q_dim:(h + 1) * q_dim].set(w2q.T)
    bq2 = jnp.tile(b2q, heads)

    # --- proj_k / proj_v fused: row-concat Linear1s, block-diag Linear2s ---
    Wkv1 = jnp.concatenate([w1k.T, w1v.T], axis=0)    # (2*v_dim, v_dim)
    bkv1 = jnp.concatenate([b1k, b1v], axis=0)
    Wkv2 = jnp.zeros((2 * D, 2 * v_dim), f32)
    Wkv2 = Wkv2.at[:D, :v_dim].set(w2k.T).at[D:, v_dim:].set(w2v.T)
    bkv2 = jnp.concatenate([b2k, b2v], axis=0)

    # --- proj_out folded into final_out Linear1 (per head, linear composition) ---
    wmats = [("wq1", Wq1), ("wq2", Wq2), ("wkv1", Wkv1), ("wkv2", Wkv2)]
    bof1 = bf1
    for h in range(heads):
        wf1_h = wf1[h * D:(h + 1) * D, :]             # (D, D), in -> out
        wmats.append((f"wof1_{h}", (wo @ wf1_h).T))   # (D, D) channel-major operator
        bof1 = bof1 + wf1_h.T @ bo
    wmats.append(("wf2", wf2.T))

    bvecs = [("bq1", bq1), ("bq2", bq2), ("bkv1", bkv1), ("bkv2", bkv2),
             ("bof1", bof1), ("bf2", bf2)]

    wslab, woffs = _pack_weight_slab(wmats)
    bslab, boffs = _pack_bias_slab(bvecs)
    return wslab, woffs, bslab, boffs


def _multiheads_kernel(heads, out_dim, scale, woffs, boffs,
                       xq_ref, xf_ref, w_ref, b_ref, out_ref):
    D = out_dim
    _, q_dim, L = xq_ref.shape
    _, v_dim, HN = xf_ref.shape
    N = HN // heads

    def W(name):                          # bf16 (out, in) operator slice
        r, nr, nc = woffs[name]
        return w_ref[r:r + nr, 0:nc]

    def Bv(name):                         # f32 (out, 1) bias column
        r, n = boffs[name]
        return b_ref[r:r + n, :]

    def mm(wt, x):                        # bf16 MXU operands, f32 accumulation
        return jnp.dot(wt, x.astype(jnp.bfloat16),
                       preferred_element_type=jnp.float32)

    xq = xq_ref[0]                        # (q_dim, L)        channel-major bf16
    xf = xf_ref[0]                        # (v_dim, heads*N)  channel-major bf16

    # --- q path: fused (proj_q_c . Linear1) -> LeakyReLU -> block-diag Linear2
    # -> GELU; all heads in one pass, tokens on lanes. ---
    h1 = _leaky_relu(mm(W("wq1"), xq) + Bv("bq1"))        # (heads*q_dim, L)
    qf = _gelu(mm(W("wq2"), h1) + Bv("bq2")) * scale      # (heads*D, L)

    # --- fused k/v path over all (head, token) columns ---
    hk = _leaky_relu(mm(W("wkv1"), xf) + Bv("bkv1"))      # (2*v_dim, heads*N)
    kv = _gelu(mm(W("wkv2"), hk) + Bv("bkv2"))            # (2*D,    heads*N)

    # --- attention per head (heads is tiny & static); contractions kept in
    # standard (M,K)@(K,N) / A@B^T form so the MXU sees minor-dim contractions.
    # proj_out + final_out.Linear1 are folded: accumulate per head (no concat).
    y1 = jnp.zeros((D, L), jnp.float32)
    for h in range(heads):
        q_h = qf[h * D:(h + 1) * D, :].T.astype(jnp.bfloat16)       # (L, D)
        k_h = kv[0:D, h * N:(h + 1) * N].astype(jnp.bfloat16)       # (D, N)
        v_h = kv[D:2 * D, h * N:(h + 1) * N].astype(jnp.bfloat16)   # (D, N)

        s = jnp.dot(q_h, k_h, preferred_element_type=jnp.float32)   # (L, N)
        s = s - jnp.max(s, axis=-1, keepdims=True)
        p = jnp.exp(s)
        p = p * pl.reciprocal(jnp.sum(p, axis=-1, keepdims=True), approx=True)

        # enhanced, channel-major: (D, L) = v_h @ p^T (contraction on minor dims)
        enh_h = jax.lax.dot_general(
            v_h, p.astype(jnp.bfloat16),
            dimension_numbers=(((1,), (1,)), ((), ())),
            preferred_element_type=jnp.float32)                     # (D, L)

        y1 = y1 + mm(W(f"wof1_{h}"), enh_h)

    # --- final_out: fused-Linear1 bias + LeakyReLU, then Linear2 + LeakyReLU ---
    y1 = _leaky_relu(y1 + Bv("bof1"))                     # (D, L)
    y = _leaky_relu(mm(W("wf2"), y1) + Bv("bf2"))         # (D, L)

    out_ref[0] = y


def multi_heads_forward(query, fts, params, heads_num):
    """MultiHeads forward.  query: (B, q_dim, H, W) f32;
    fts: (B*heads, v_dim, N) f32, batch-major / head-minor ('(b h)').
    Returns (B, H, W, out_dim) f32."""
    B, q_dim, Himg, Wimg = query.shape
    L = Himg * Wimg
    out_dim = params["w2q"].shape[1]
    v_dim = params["w1k"].shape[0]
    Bh, vd, N = fts.shape
    assert Bh == B * heads_num and vd == v_dim
    scale = float(out_dim) ** (-0.5)      # torch: self.scale = out_dim ** -0.5

    # Inputs stay channel-major (tokens land on lanes inside the kernel); only
    # fts needs a cheap head-grouping transpose, done once in XLA.  bf16: these
    # feed only bf16 MXU matmuls.
    xq = query.reshape(B, q_dim, L).astype(jnp.bfloat16)
    xf = jnp.transpose(fts.reshape(B, heads_num, v_dim, N), (0, 2, 1, 3))
    xf = xf.reshape(B, v_dim, heads_num * N).astype(jnp.bfloat16)

    # Offline linear folding + slab packing (cache across calls in production).
    wslab, woffs, bslab, boffs = _fuse_and_pack(params, heads_num, q_dim, v_dim,
                                                out_dim)

    kernel = functools.partial(_multiheads_kernel, heads_num, out_dim, scale,
                               woffs, boffs)

    # TODO(synk): pipeline_mode=pl.Buffered(1) on the two constant weight slabs
    # would halve their VMEM footprint once weights grow (constant index map).
    out = pl.pallas_call(
        kernel,
        out_shape=jax.ShapeDtypeStruct((B, out_dim, L), jnp.float32),
        grid=(B,),                        # one batch per step -> >=2 parallel steps
        in_specs=[
            pl.BlockSpec((1, q_dim, L), lambda b: (b, 0, 0)),
            pl.BlockSpec((1, v_dim, heads_num * N), lambda b: (b, 0, 0)),
            pl.BlockSpec(wslab.shape, lambda b: (0, 0)),
            pl.BlockSpec(bslab.shape, lambda b: (0, 0)),
        ],
        out_specs=pl.BlockSpec((1, out_dim, L), lambda b: (b, 0, 0)),
        compiler_params=pltpu.CompilerParams(
            dimension_semantics=("parallel",),
            vmem_limit_bytes=32 * 1024 * 1024),
    )(xq, xf, wslab, bslab)

    # TODO(synk): at production (large L, N) add an N grid axis with an online
    # softmax (VMEM accumulators + pl.when init/finalize, axis "arbitrary") and
    # an L-tile "parallel" axis, re-deriving tile sizes for v7x's 64 MiB VMEM.
    return jnp.transpose(out.reshape(B, out_dim, Himg, Wimg), (0, 2, 3, 1))


def _reference_forward(query, fts, params, heads):
    """Pure-JAX f32 reference mirroring the PyTorch module (no fusion)."""
    B, q_dim, Himg, Wimg = query.shape
    L = Himg * Wimg
    D = params["w2q"].shape[1]
    scale = float(D) ** (-0.5)

    xq = jnp.transpose(query.reshape(B, q_dim, L), (0, 2, 1))         # (B, L, q_dim)
    q1 = xq @ params["wc"] + params["bc"]                             # (B, L, heads*q_dim)
    q1 = jnp.transpose(q1.reshape(B, L, heads, q_dim), (0, 2, 1, 3))
    q1 = q1.reshape(B * heads, L, q_dim)                              # '(b h) (l w) c'
    q = _gelu(_leaky_relu(q1 @ params["w1q"] + params["b1q"]) @ params["w2q"]
              + params["b2q"])

    xf = jnp.transpose(fts, (0, 2, 1))                                # (B*heads, N, v_dim)
    k = _gelu(_leaky_relu(xf @ params["w1k"] + params["b1k"]) @ params["w2k"]
              + params["b2k"])
    v = _gelu(_leaky_relu(xf @ params["w1v"] + params["b1v"]) @ params["w2v"]
              + params["b2v"])

    attn = jnp.einsum("gld,gnd->gln", q, k) * scale
    attn = jax.nn.softmax(attn, axis=-1)
    enh = jnp.einsum("gln,gnd->gld", attn, v)                         # (B*heads, L, D)

    ho = enh @ params["wo"] + params["bo"]                            # (B*heads, L, D)
    ho = jnp.transpose(ho.reshape(B, heads, L, D), (0, 2, 1, 3)).reshape(B, L, heads * D)
    y = _leaky_relu(ho @ params["wf1"] + params["bf1"])
    y = _leaky_relu(y @ params["wf2"] + params["bf2"])
    return y.reshape(B, Himg, Wimg, D)


def init_params(key, heads_num, q_dim, v_dim, out_dim):
    """Random init (uniform +-1/sqrt(fan_in), like torch defaults).
    Layout conventions for loading real torch weights:
      * Linear/conv weights are stored transposed: (in_features, out_features).
      * wc (q_dim, heads*q_dim): columns head-major (h outer, c inner), i.e.
        conv.weight.reshape(heads*q_dim, q_dim).T  -- matches 'b (h c) l w'.
      * wf1 (heads*out_dim, out_dim): rows head-major -- matches '(h c)' concat.
    """
    ks = jax.random.split(key, 10)

    def lin(k, shape_w, shape_b, fan_in):
        bound = 1.0 / (fan_in ** 0.5)
        kw, kb = jax.random.split(k)
        w = jax.random.uniform(kw, shape_w, jnp.float32, -bound, bound)
        b = jax.random.uniform(kb, shape_b, jnp.float32, -bound, bound)
        return w, b

    p = {}
    p["wc"], p["bc"] = lin(ks[0], (q_dim, heads_num * q_dim), (1, heads_num * q_dim), q_dim)
    p["w1q"], p["b1q"] = lin(ks[1], (q_dim, q_dim), (1, q_dim), q_dim)
    p["w2q"], p["b2q"] = lin(ks[2], (q_dim, out_dim), (1, out_dim), q_dim)
    p["w1k"], p["b1k"] = lin(ks[3], (v_dim, v_dim), (1, v_dim), v_dim)
    p["w2k"], p["b2k"] = lin(ks[4], (v_dim, out_dim), (1, out_dim), v_dim)
    p["w1v"], p["b1v"] = lin(ks[5], (v_dim, v_dim), (1, v_dim), v_dim)
    p["w2v"], p["b2v"] = lin(ks[6], (v_dim, out_dim), (1, out_dim), v_dim)
    p["wo"], p["bo"] = lin(ks[7], (out_dim, out_dim), (1, out_dim), out_dim)
    p["wf1"], p["bf1"] = lin(ks[8], (heads_num * out_dim, out_dim), (1, out_dim),
                             out_dim * heads_num)
    p["wf2"], p["bf2"] = lin(ks[9], (out_dim, out_dim), (1, out_dim), out_dim)
    return p


if __name__ == "__main__":
    heads_num, q_dim, v_dim = 2, 8, 16
    out_dim = q_dim            # module default: out_dim = q_dim
    B, H, W, N = 2, 8, 8, 32

    key = jax.random.PRNGKey(0)
    kq, kf, kp = jax.random.split(key, 3)
    query = jax.random.normal(kq, (B, q_dim, H, W), jnp.float32)
    # torch einsum('b c m, b c n -> b m n') requires k/v batch == B*heads_num
    fts = jax.random.normal(kf, (B * heads_num, v_dim, N), jnp.float32)

    params = init_params(kp, heads_num, q_dim, v_dim, out_dim)

    out = multi_heads_forward(query, fts, params, heads_num)
    jax.block_until_ready(out)

    ref = _reference_forward(query, fts, params, heads_num)
    assert out.shape == (B, H, W, out_dim)
    assert bool(jnp.all(jnp.isfinite(out)))
    # bf16 MXU operands + approx reciprocal: compare with a loose relative bound
    # (catches layout / fusion bugs, tolerates bf16 rounding).
    rel = float(jnp.max(jnp.abs(out - ref)) / (jnp.max(jnp.abs(ref)) + 1e-6))
    assert rel < 0.15, f"kernel/reference mismatch: rel={rel}"
    print("KERNEL_OK")
</pallas_src>

<mosaic_0001>
module attributes {stable_mosaic.version = 11 : i64} {
  func.func @_multiheads_kernel(%arg0: i32, %arg1: memref<1x8x64xbf16, #tpu.memory_space<vmem>>, %arg2: memref<1x16x64xbf16, #tpu.memory_space<vmem>>, %arg3: memref<128x128xbf16, #tpu.memory_space<vmem>>, %arg4: memref<96x1xf32, #tpu.memory_space<vmem>>, %arg5: memref<1x8x64xf32, #tpu.memory_space<vmem>>) attributes {dimension_semantics = [#tpu.dimension_semantics<parallel>], iteration_bounds = array<i64: 2>, scalar_prefetch = 0 : i64, scratch_operands = 0 : i64, tpu.core_type = #tpu.core_type<tc>, window_params = [{transform_indices = @transform_0, window_bounds = array<i64: 1, 8, 64>}, {transform_indices = @transform_1, window_bounds = array<i64: 1, 16, 64>}, {pipeline_mode = #tpu.pipeline_mode<synchronous>, transform_indices = @transform_2, window_bounds = array<i64: 128, 128>}, {pipeline_mode = #tpu.pipeline_mode<synchronous>, transform_indices = @transform_3, window_bounds = array<i64: 96, 1>}, {transform_indices = @transform_4, window_bounds = array<i64: 1, 8, 64>}]} {
    %c0 = arith.constant 0 : index
    %c0_0 = arith.constant 0 : index
    %c0_1 = arith.constant 0 : index
    %0 = vector.load %arg1[%c0, %c0_0, %c0_1] : memref<1x8x64xbf16, #tpu.memory_space<vmem>>, vector<1x8x64xbf16>
    %1 = vector.shape_cast %0 : vector<1x8x64xbf16> to vector<8x64xbf16>
    %c0_2 = arith.constant 0 : index
    %c0_3 = arith.constant 0 : index
    %c0_4 = arith.constant 0 : index
    %2 = vector.load %arg2[%c0_2, %c0_3, %c0_4] : memref<1x16x64xbf16, #tpu.memory_space<vmem>>, vector<1x16x64xbf16>
    %3 = vector.shape_cast %2 : vector<1x16x64xbf16> to vector<16x64xbf16>
    %c0_5 = arith.constant 0 : index
    %c0_6 = arith.constant 0 : index
    %4 = vector.load %arg3[%c0_5, %c0_6] : memref<128x128xbf16, #tpu.memory_space<vmem>>, vector<16x8xbf16>
    %cst = arith.constant dense<0.000000e+00> : vector<16x64xf32>
    %5 = tpu.matmul %4, %1, %cst {dimension_numbers = #tpu.dot_dimension_numbers<[1], [0], [0], [1], [0, 0, 1, 1], [], []>} : vector<16x8xbf16>, vector<8x64xbf16>, vector<16x64xf32> -> vector<16x64xf32>
    %c0_7 = arith.constant 0 : index
    %c0_8 = arith.constant 0 : index
    %6 = vector.load %arg4[%c0_7, %c0_8] : memref<96x1xf32, #tpu.memory_space<vmem>>, vector<16x1xf32>
    %7 = vector.broadcast %6 : vector<16x1xf32> to vector<16x64xf32>
    %8 = arith.addf %5, %7 : vector<16x64xf32>
    %cst_9 = arith.constant 0.000000e+00 : f32
    %9 = vector.broadcast %cst_9 : f32 to vector<16x64xf32>
    %10 = arith.cmpf ogt, %8, %9 : vector<16x64xf32>
    %cst_10 = arith.constant 0.00999999977 : f32
    %11 = vector.broadcast %cst_10 : f32 to vector<16x64xf32>
    %12 = arith.mulf %11, %8 : vector<16x64xf32>
    %13 = arith.select %10, %8, %12 : vector<16x64xi1>, vector<16x64xf32>
    %c16 = arith.constant 16 : index
    %c0_11 = arith.constant 0 : index
    %14 = vector.load %arg3[%c16, %c0_11] : memref<128x128xbf16, #tpu.memory_space<vmem>>, vector<16x16xbf16>
    %15 = arith.truncf %13 : vector<16x64xf32> to vector<16x64xbf16>
    %cst_12 = arith.constant dense<0.000000e+00> : vector<16x64xf32>
    %16 = tpu.matmul %14, %15, %cst_12 {dimension_numbers = #tpu.dot_dimension_numbers<[1], [0], [0], [1], [0, 0, 1, 1], [], []>} : vector<16x16xbf16>, vector<16x64xbf16>, vector<16x64xf32> -> vector<16x64xf32>
    %c16_13 = arith.constant 16 : index
    %c0_14 = arith.constant 0 : index
    %17 = vector.load %arg4[%c16_13, %c0_14] : memref<96x1xf32, #tpu.memory_space<vmem>>, vector<16x1xf32>
    %18 = vector.broadcast %17 : vector<16x1xf32> to vector<16x64xf32>
    %19 = arith.addf %16, %18 : vector<16x64xf32>
    %cst_15 = arith.constant 5.000000e-01 : f32
    %20 = vector.broadcast %cst_15 : f32 to vector<16x64xf32>
    %21 = arith.mulf %20, %19 : vector<16x64xf32>
    %cst_16 = arith.constant 0.707106769 : f32
    %22 = vector.broadcast %cst_16 : f32 to vector<16x64xf32>
    %23 = arith.mulf %19, %22 : vector<16x64xf32>
    %24 = math.erf %23 : vector<16x64xf32>
    %cst_17 = arith.constant 1.000000e+00 : f32
    %25 = vector.broadcast %cst_17 : f32 to vector<16x64xf32>
    %26 = arith.addf %25, %24 : vector<16x64xf32>
    %27 = arith.mulf %21, %26 : vector<16x64xf32>
    %cst_18 = arith.constant 0.353553385 : f32
    %28 = vector.broadcast %cst_18 : f32 to vector<16x64xf32>
    %29 = arith.mulf %27, %28 : vector<16x64xf32>
    %c32 = arith.constant 32 : index
    %c0_19 = arith.constant 0 : index
    %30 = vector.load %arg3[%c32, %c0_19] : memref<128x128xbf16, #tpu.memory_space<vmem>>, vector<32x16xbf16>
    %cst_20 = arith.constant dense<0.000000e+00> : vector<32x64xf32>
    %31 = tpu.matmul %30, %3, %cst_20 {dimension_numbers = #tpu.dot_dimension_numbers<[1], [0], [0], [1], [0, 0, 1, 1], [], []>} : vector<32x16xbf16>, vector<16x64xbf16>, vector<32x64xf32> -> vector<32x64xf32>
    %c32_21 = arith.constant 32 : index
    %c0_22 = arith.constant 0 : index
    %32 = vector.load %arg4[%c32_21, %c0_22] : memref<96x1xf32, #tpu.memory_space<vmem>>, vector<32x1xf32>
    %33 = vector.broadcast %32 : vector<32x1xf32> to vector<32x64xf32>
    %34 = arith.addf %31, %33 : vector<32x64xf32>
    %cst_23 = arith.constant 0.000000e+00 : f32
    %35 = vector.broadcast %cst_23 : f32 to vector<32x64xf32>
    %36 = arith.cmpf ogt, %34, %35 : vector<32x64xf32>
    %cst_24 = arith.constant 0.00999999977 : f32
    %37 = vector.broadcast %cst_24 : f32 to vector<32x64xf32>
    %38 = arith.mulf %37, %34 : vector<32x64xf32>
    %39 = arith.select %36, %34, %38 : vector<32x64xi1>, vector<32x64xf32>
    %c64 = arith.constant 64 : index
    %c0_25 = arith.constant 0 : index
    %40 = vector.load %arg3[%c64, %c0_25] : memref<128x128xbf16, #tpu.memory_space<vmem>>, vector<16x32xbf16>
    %41 = arith.truncf %39 : vector<32x64xf32> to vector<32x64xbf16>
    %cst_26 = arith.constant dense<0.000000e+00> : vector<16x64xf32>
    %42 = tpu.matmul %40, %41, %cst_26 {dimension_numbers = #tpu.dot_dimension_numbers<[1], [0], [0], [1], [0, 0, 1, 1], [], []>} : vector<16x32xbf16>, vector<32x64xbf16>, vector<16x64xf32> -> vector<16x64xf32>
    %c64_27 = arith.constant 64 : index
    %c0_28 = arith.constant 0 : index
    %43 = vector.load %arg4[%c64_27, %c0_28] : memref<96x1xf32, #tpu.memory_space<vmem>>, vector<16x1xf32>
    %44 = vector.broadcast %43 : vector<16x1xf32> to vector<16x64xf32>
    %45 = arith.addf %42, %44 : vector<16x64xf32>
    %cst_29 = arith.constant 5.000000e-01 : f32
    %46 = vector.broadcast %cst_29 : f32 to vector<16x64xf32>
    %47 = arith.mulf %46, %45 : vector<16x64xf32>
    %cst_30 = arith.constant 0.707106769 : f32
    %48 = vector.broadcast %cst_30 : f32 to vector<16x64xf32>
    %49 = arith.mulf %45, %48 : vector<16x64xf32>
    %50 = math.erf %49 : vector<16x64xf32>
    %cst_31 = arith.constant 1.000000e+00 : f32
    %51 = vector.broadcast %cst_31 : f32 to vector<16x64xf32>
    %52 = arith.addf %51, %50 : vector<16x64xf32>
    %53 = arith.mulf %47, %52 : vector<16x64xf32>
    %cst_32 = arith.constant 0.000000e+00 : f32
    %54 = vector.broadcast %cst_32 : f32 to vector<8x64xf32>
    %55 = vector.extract_strided_slice %29 {offsets = [0, 0], sizes = [8, 64], strides = [1, 1]} : vector<16x64xf32> to vector<8x64xf32>
    %56 = tpu.transpose %55, [1, 0] : vector<8x64xf32> -> vector<64x8xf32>
    %57 = arith.truncf %56 : vector<64x8xf32> to vector<64x8xbf16>
    %58 = vector.extract_strided_slice %53 {offsets = [0, 0], sizes = [8, 32], strides = [1, 1]} : vector<16x64xf32> to vector<8x32xf32>
    %59 = arith.truncf %58 : vector<8x32xf32> to vector<8x32xbf16>
    %60 = vector.extract_strided_slice %53 {offsets = [8, 0], sizes = [8, 32], strides = [1, 1]} : vector<16x64xf32> to vector<8x32xf32>
    %61 = arith.truncf %60 : vector<8x32xf32> to vector<8x32xbf16>
    %cst_33 = arith.constant dense<0.000000e+00> : vector<64x32xf32>
    %62 = tpu.matmul %57, %59, %cst_33 {dimension_numbers = #tpu.dot_dimension_numbers<[1], [0], [0], [1], [0, 0, 1, 1], [], []>} : vector<64x8xbf16>, vector<8x32xbf16>, vector<64x32xf32> -> vector<64x32xf32>
    %cst_34 = arith.constant dense<0xFF800000> : vector<64xf32>
    %63 = vector.multi_reduction <maximumf>, %62, %cst_34 [1] : vector<64x32xf32> to vector<64xf32>
    %64 = vector.shape_cast %63 : vector<64xf32> to vector<64x1xf32>
    %65 = vector.broadcast %64 : vector<64x1xf32> to vector<64x32xf32>
    %66 = arith.subf %62, %65 : vector<64x32xf32>
    %67 = math.exp %66 : vector<64x32xf32>
    %cst_35 = arith.constant dense<0.000000e+00> : vector<64xf32>
    %68 = vector.multi_reduction <add>, %67, %cst_35 [1] : vector<64x32xf32> to vector<64xf32>
    %69 = vector.shape_cast %68 : vector<64xf32> to vector<64x1xf32>
    %70 = tpu.reciprocal %69 {approx = true} : vector<64x1xf32> -> vector<64x1xf32>
    %71 = vector.broadcast %70 : vector<64x1xf32> to vector<64x32xf32>
    %72 = arith.mulf %67, %71 : vector<64x32xf32>
    %73 = arith.truncf %72 : vector<64x32xf32> to vector<64x32xbf16>
    %cst_36 = arith.constant dense<0.000000e+00> : vector<8x64xf32>
    %74 = tpu.matmul %61, %73, %cst_36 {dimension_numbers = #tpu.dot_dimension_numbers<[1], [1], [0], [0], [0, 0, 1, 0], [], []>} : vector<8x32xbf16>, vector<64x32xbf16>, vector<8x64xf32> -> vector<8x64xf32>
    %c80 = arith.constant 80 : index
    %c0_37 = arith.constant 0 : index
    %75 = vector.load %arg3[%c80, %c0_37] : memref<128x128xbf16, #tpu.memory_space<vmem>>, vector<8x8xbf16>
    %76 = arith.truncf %74 : vector<8x64xf32> to vector<8x64xbf16>
    %cst_38 = arith.constant dense<0.000000e+00> : vector<8x64xf32>
    %77 = tpu.matmul %75, %76, %cst_38 {dimension_numbers = #tpu.dot_dimension_numbers<[1], [0], [0], [1], [0, 0, 1, 1], [], []>} : vector<8x8xbf16>, vector<8x64xbf16>, vector<8x64xf32> -> vector<8x64xf32>
    %78 = arith.addf %54, %77 : vector<8x64xf32>
    %79 = vector.extract_strided_slice %29 {offsets = [8, 0], sizes = [8, 64], strides = [1, 1]} : vector<16x64xf32> to vector<8x64xf32>
    %80 = tpu.transpose %79, [1, 0] : vector<8x64xf32> -> vector<64x8xf32>
    %81 = arith.truncf %80 : vector<64x8xf32> to vector<64x8xbf16>
    %82 = vector.extract_strided_slice %53 {offsets = [0, 32], sizes = [8, 32], strides = [1, 1]} : vector<16x64xf32> to vector<8x32xf32>
    %83 = arith.truncf %82 : vector<8x32xf32> to vector<8x32xbf16>
    %84 = vector.extract_strided_slice %53 {offsets = [8, 32], sizes = [8, 32], strides = [1, 1]} : vector<16x64xf32> to vector<8x32xf32>
    %85 = arith.truncf %84 : vector<8x32xf32> to vector<8x32xbf16>
    %cst_39 = arith.constant dense<0.000000e+00> : vector<64x32xf32>
    %86 = tpu.matmul %81, %83, %cst_39 {dimension_numbers = #tpu.dot_dimension_numbers<[1], [0], [0], [1], [0, 0, 1, 1], [], []>} : vector<64x8xbf16>, vector<8x32xbf16>, vector<64x32xf32> -> vector<64x32xf32>
    %cst_40 = arith.constant dense<0xFF800000> : vector<64xf32>
    %87 = vector.multi_reduction <maximumf>, %86, %cst_40 [1] : vector<64x32xf32> to vector<64xf32>
    %88 = vector.shape_cast %87 : vector<64xf32> to vector<64x1xf32>
    %89 = vector.broadcast %88 : vector<64x1xf32> to vector<64x32xf32>
    %90 = arith.subf %86, %89 : vector<64x32xf32>
    %91 = math.exp %90 : vector<64x32xf32>
    %cst_41 = arith.constant dense<0.000000e+00> : vector<64xf32>
    %92 = vector.multi_reduction <add>, %91, %cst_41 [1] : vector<64x32xf32> to vector<64xf32>
    %93 = vector.shape_cast %92 : vector<64xf32> to vector<64x1xf32>
    %94 = tpu.reciprocal %93 {approx = true} : vector<64x1xf32> -> vector<64x1xf32>
    %95 = vector.broadcast %94 : vector<64x1xf32> to vector<64x32xf32>
    %96 = arith.mulf %91, %95 : vector<64x32xf32>
    %97 = arith.truncf %96 : vector<64x32xf32> to vector<64x32xbf16>
    %cst_42 = arith.constant dense<0.000000e+00> : vector<8x64xf32>
    %98 = tpu.matmul %85, %97, %cst_42 {dimension_numbers = #tpu.dot_dimension_numbers<[1], [1], [0], [0], [0, 0, 1, 0], [], []>} : vector<8x32xbf16>, vector<64x32xbf16>, vector<8x64xf32> -> vector<8x64xf32>
    %c96 = arith.constant 96 : index
    %c0_43 = arith.constant 0 : index
    %99 = vector.load %arg3[%c96, %c0_43] : memref<128x128xbf16, #tpu.memory_space<vmem>>, vector<8x8xbf16>
    %100 = arith.truncf %98 : vector<8x64xf32> to vector<8x64xbf16>
    %cst_44 = arith.constant dense<0.000000e+00> : vector<8x64xf32>
    %101 = tpu.matmul %99, %100, %cst_44 {dimension_numbers = #tpu.dot_dimension_numbers<[1], [0], [0], [1], [0, 0, 1, 1], [], []>} : vector<8x8xbf16>, vector<8x64xbf16>, vector<8x64xf32> -> vector<8x64xf32>
    %102 = arith.addf %78, %101 : vector<8x64xf32>
    %c80_45 = arith.constant 80 : index
    %c0_46 = arith.constant 0 : index
    %103 = vector.load %arg4[%c80_45, %c0_46] : memref<96x1xf32, #tpu.memory_space<vmem>>, vector<8x1xf32>
    %104 = vector.broadcast %103 : vector<8x1xf32> to vector<8x64xf32>
    %105 = arith.addf %102, %104 : vector<8x64xf32>
    %cst_47 = arith.constant 0.000000e+00 : f32
    %106 = vector.broadcast %cst_47 : f32 to vector<8x64xf32>
    %107 = arith.cmpf ogt, %105, %106 : vector<8x64xf32>
    %cst_48 = arith.constant 0.00999999977 : f32
    %108 = vector.broadcast %cst_48 : f32 to vector<8x64xf32>
    %109 = arith.mulf %108, %105 : vector<8x64xf32>
    %110 = arith.select %107, %105, %109 : vector<8x64xi1>, vector<8x64xf32>
    %c112 = arith.constant 112 : index
    %c0_49 = arith.constant 0 : index
    %111 = vector.load %arg3[%c112, %c0_49] : memref<128x128xbf16, #tpu.memory_space<vmem>>, vector<8x8xbf16>
    %112 = arith.truncf %110 : vector<8x64xf32> to vector<8x64xbf16>
    %cst_50 = arith.constant dense<0.000000e+00> : vector<8x64xf32>
    %113 = tpu.matmul %111, %112, %cst_50 {dimension_numbers = #tpu.dot_dimension_numbers<[1], [0], [0], [1], [0, 0, 1, 1], [], []>} : vector<8x8xbf16>, vector<8x64xbf16>, vector<8x64xf32> -> vector<8x64xf32>
    %c88 = arith.constant 88 : index
    %c0_51 = arith.constant 0 : index
    %114 = vector.load %arg4[%c88, %c0_51] : memref<96x1xf32, #tpu.memory_space<vmem>>, vector<8x1xf32>
    %115 = vector.broadcast %114 : vector<8x1xf32> to vector<8x64xf32>
    %116 = arith.addf %113, %115 : vector<8x64xf32>
    %cst_52 = arith.constant 0.000000e+00 : f32
    %117 = vector.broadcast %cst_52 : f32 to vector<8x64xf32>
    %118 = arith.cmpf ogt, %116, %117 : vector<8x64xf32>
    %cst_53 = arith.constant 0.00999999977 : f32
    %119 = vector.broadcast %cst_53 : f32 to vector<8x64xf32>
    %120 = arith.mulf %119, %116 : vector<8x64xf32>
    %121 = arith.select %118, %116, %120 : vector<8x64xi1>, vector<8x64xf32>
    %c0_54 = arith.constant 0 : index
    %c0_55 = arith.constant 0 : index
    %c0_56 = arith.constant 0 : index
    %122 = vector.load %arg5[%c0_54, %c0_55, %c0_56] : memref<1x8x64xf32, #tpu.memory_space<vmem>>, vector<1x8x64xf32>
    %123 = vector.shape_cast %122 : vector<1x8x64xf32> to vector<8x64xf32>
    %124 = vector.shape_cast %121 : vector<8x64xf32> to vector<1x8x64xf32>
    tpu.vector_store %arg5[%c0_54, %c0_55, %c0_56], %124 {strides = array<i32>} : memref<1x8x64xf32, #tpu.memory_space<vmem>>, vector<1x8x64xf32>,
    return
  }
  func.func @transform_0(%arg0: i32) -> (i32, i32, i32) {
    %c0_i32 = arith.constant 0 : i32
    %c0_i32_0 = arith.constant 0 : i32
    %c0_i32_1 = arith.constant 0 : i32
    return %arg0, %c0_i32, %c0_i32_0 : i32, i32, i32
  }
  func.func @transform_1(%arg0: i32) -> (i32, i32, i32) {
    %c0_i32 = arith.constant 0 : i32
    %c0_i32_0 = arith.constant 0 : i32
    %c0_i32_1 = arith.constant 0 : i32
    return %arg0, %c0_i32, %c0_i32_0 : i32, i32, i32
  }
  func.func @transform_2(%arg0: i32) -> (i32, i32) {
    %c0_i32 = arith.constant 0 : i32
    %c0_i32_0 = arith.constant 0 : i32
    %c0_i32_1 = arith.constant 0 : i32
    return %c0_i32, %c0_i32_0 : i32, i32
  }
  func.func @transform_3(%arg0: i32) -> (i32, i32) {
    %c0_i32 = arith.constant 0 : i32
    %c0_i32_0 = arith.constant 0 : i32
    %c0_i32_1 = arith.constant 0 : i32
    return %c0_i32, %c0_i32_0 : i32, i32
  }
  func.func @transform_4(%arg0: i32) -> (i32, i32, i32) {
    %c0_i32 = arith.constant 0 : i32
    %c0_i32_0 = arith.constant 0 : i32
    %c0_i32_1 = arith.constant 0 : i32
    return %arg0, %c0_i32, %c0_i32_0 : i32, i32, i32
  }
}

</mosaic_0001>

<llo_original>
// kernel: tpu_custom_call.1
$region0: #{tpu_custom_call.1}
  #allocation0 [shape = 'u32[]', space=smem, size = 0x4, offset = 0x4, fixed_abs, tag = 'smem constant byte address 0x4 - core index']
  #allocation1 [shape = 'u32[144,128]{1,0:T(1,128)}', space=vmem, size = 0x12000, scoped, tag = 'internal scratch']
  %s0 = inlined_call_operand.vmem [shape: bf16[2,8,64], index: 0, kind: input, shape index: {}]
  %s1 = inlined_call_operand.vmem [shape: bf16[2,16,64], index: 1, kind: input, shape index: {}]
  %s2 = inlined_call_operand.vmem [shape: bf16[128,128], index: 2, kind: input, shape index: {}]
  %s3 = inlined_call_operand.vmem [shape: f32[96,1], index: 3, kind: input, shape index: {}]
  %s4 = inlined_call_operand.hbm [shape: f32[2,8,64], index: 4, kind: output, shape index: {}]
  %s5 = sld [smem:[#allocation0]]
  $region49: #{tpu_custom_call.1} parent=0
    _
  %s7 = ssub.s32 1, %s5
  %s8 = scalar_select 0, %s7, %s5
  $region1: #{tpu_custom_call.1} parent=0
    #allocation2 [shape = 'u8[8192]{0}', space=vmem, size = 0x2000, scoped, tag = 'output window, operand 0']
    #allocation3 [shape = 's32[2]{0}', space=sflag, size = 0x8, scoped, tag = 'scoped memory for tpu_custom_call.1']
    %9 = vsyncpa [#allocation3], 0
    %s10 = scalar_lea.sflag [#allocation3], 1
    %11 = vsyncpa %s10, 0
    loop: start=0, step=1, limit=4
    $region2: #{tpu_custom_call.1} parent=1 // loop_pre_header
      _
    $region3: #{tpu_custom_call.1} parent=1 // loop_header
      %s13 = sphi 0, %s17
      %p14 = scmp.ge.s32.totalorder %s13, 4
      %s23 = sphi 0, %s25
      %s26 = sphi 0, %s23
      %s27 = sphi 0, %s26
      %s43 = sphi 0, %s27
      %s49 = sphi 0, %s51
      %s52 = sphi 0, %s49
      %s53 = sphi 0, %s52
      %s69 = sphi 0, %s53
      %s73 = sphi 0, %s73
      %s75 = sphi 0, %s73
      %s76 = sphi 0, %s75
      %s90 = sphi 0, %s76
      %s94 = sphi 0, %s94
      %s96 = sphi 0, %s94
      %s97 = sphi 0, %s96
      %s111 = sphi 0, %s97
      %s117 = sphi 0, %s119
      %s120 = sphi 0, %s117
      %s121 = sphi 0, %s120
      %s137 = sphi 0, %s121
    $region4: #{tpu_custom_call.1} parent=1 // loop_header_branch
      %16 = sbr.rel (%p14) target = $region8
    $region5: #{tpu_custom_call.1} parent=1 // loop_body
      %s18 = ssub.s32 %s13, 1
      %s19 = ssub.s32 %s13, 2
      %s20 = sadd.s32 %s13, 1
      %s21 = ssub.s32 %s13, %s20
      %p22 = scmp.eq.s32.totalorder %s21, 0
      %s24 = sadd.s32 %s23, 1
      %s25 = scalar_select %p22, %s23, %s24
      %p28 = pneg %p22
      %p29 = scmp.eq.s32.totalorder %s13, 1
      %p30 = por %p28, %p29
      %p31 = scmp.ne.s32.totalorder %s23, %s26
      %p32 = scmp.eq.s32.totalorder %s13, 0
      %p33 = por %p31, %p32
      %p34 = scmp.ne.s32.totalorder %s23, %s26
      %p35 = scmp.eq.s32.totalorder %s18, 1
      %p36 = por %p34, %p35
      %p37 = scmp.ne.s32.totalorder %s26, %s27
      %p38 = scmp.eq.s32.totalorder %s18, 0
      %p39 = por %p37, %p38
      %p40 = scmp.ne.s32.totalorder %s26, %s27
      %p41 = scmp.eq.s32.totalorder %s19, 1
      %p42 = por %p40, %p41
      %p44 = scmp.ne.s32.totalorder %s27, %s43
      %p45 = scmp.eq.s32.totalorder %s19, 0
      %p46 = por %p44, %p45
      %s47 = ssub.s32 %s13, %s20
      %p48 = scmp.eq.s32.totalorder %s47, 0
      %s50 = sadd.s32 %s49, 1
      %s51 = scalar_select %p48, %s49, %s50
      %p54 = pneg %p48
      %p55 = scmp.eq.s32.totalorder %s13, 1
      %p56 = por %p54, %p55
      %p57 = scmp.ne.s32.totalorder %s49, %s52
      %p58 = scmp.eq.s32.totalorder %s13, 0
      %p59 = por %p57, %p58
      %p60 = scmp.ne.s32.totalorder %s49, %s52
      %p61 = scmp.eq.s32.totalorder %s18, 1
      %p62 = por %p60, %p61
      %p63 = scmp.ne.s32.totalorder %s52, %s53
      %p64 = scmp.eq.s32.totalorder %s18, 0
      %p65 = por %p63, %p64
      %p66 = scmp.ne.s32.totalorder %s52, %s53
      %p67 = scmp.eq.s32.totalorder %s19, 1
      %p68 = por %p66, %p67
      %p70 = scmp.ne.s32.totalorder %s53, %s69
      %p71 = scmp.eq.s32.totalorder %s19, 0
      %p72 = por %p70, %p71
      %s74 = sadd.s32 %s73, 1
      %p77 = scmp.eq.s32.totalorder %s13, 1
      %p78 = scmp.ne.s32.totalorder %s73, %s75
      %p79 = scmp.eq.s32.totalorder %s13, 0
      %p80 = por %p78, %p79
      %p81 = scmp.ne.s32.totalorder %s73, %s75
      %p82 = scmp.eq.s32.totalorder %s18, 1
      %p83 = por %p81, %p82
      %p84 = scmp.ne.s32.totalorder %s75, %s76
      %p85 = scmp.eq.s32.totalorder %s18, 0
      %p86 = por %p84, %p85
      %p87 = scmp.ne.s32.totalorder %s75, %s76
      %p88 = scmp.eq.s32.totalorder %s19, 1
      %p89 = por %p87, %p88
      %p91 = scmp.ne.s32.totalorder %s76, %s90
      %p92 = scmp.eq.s32.totalorder %s19, 0
      %p93 = por %p91, %p92
      %s95 = sadd.s32 %s94, 1
      %p98 = scmp.eq.s32.totalorder %s13, 1
      %p99 = scmp.ne.s32.totalorder %s94, %s96
      %p100 = scmp.eq.s32.totalorder %s13, 0
      %p101 = por %p99, %p100
      %p102 = scmp.ne.s32.totalorder %s94, %s96
      %p103 = scmp.eq.s32.totalorder %s18, 1
      %p104 = por %p102, %p103
      %p105 = scmp.ne.s32.totalorder %s96, %s97
      %p106 = scmp.eq.s32.totalorder %s18, 0
      %p107 = por %p105, %p106
      %p108 = scmp.ne.s32.totalorder %s96, %s97
      %p109 = scmp.eq.s32.totalorder %s19, 1
      %p110 = por %p108, %p109
      %p112 = scmp.ne.s32.totalorder %s97, %s111
      %p113 = scmp.eq.s32.totalorder %s19, 0
      %p114 = por %p112, %p113
      %s115 = ssub.s32 %s13, %s20
      %p116 = scmp.eq.s32.totalorder %s115, 0
      %s118 = sadd.s32 %s117, 1
      %s119 = scalar_select %p116, %s117, %s118
      %p122 = pneg %p116
      %p123 = scmp.eq.s32.totalorder %s13, 1
      %p124 = por %p122, %p123
      %p125 = scmp.ne.s32.totalorder %s117, %s120
      %p126 = scmp.eq.s32.totalorder %s13, 0
      %p127 = por %p125, %p126
      %p128 = scmp.ne.s32.totalorder %s117, %s120
      %p129 = scmp.eq.s32.totalorder %s18, 1
      %p130 = por %p128, %p129
      %p131 = scmp.ne.s32.totalorder %s120, %s121
      %p132 = scmp.eq.s32.totalorder %s18, 0
      %p133 = por %p131, %p132
      %p134 = scmp.ne.s32.totalorder %s120, %s121
      %p135 = scmp.eq.s32.totalorder %s19, 1
      %p136 = por %p134, %p135
      %p138 = scmp.ne.s32.totalorder %s121, %s137
      %p139 = scmp.eq.s32.totalorder %s19, 0
      %p140 = por %p138, %p139
      %p141 = scmp.le.s32.totalorder 1, %s13
      %p142 = scmp.lt.s32.totalorder %s13, 3
      %p143 = pnand %p141, %p142
      %p144 = pneg %p143
      // Predicated region
      $region9: #{tpu_custom_call.1} parent=5 // pred_check
        _
      $region10: #{tpu_custom_call.1} parent=5 // pred_check_branch
        %146 = sbr.rel (%p143) target = $region12
      $region11: #{tpu_custom_call.1} parent=5 // pred_region
        %s147 = ssub.s32 %s13, 1
        // Predicated region
        $region13: #{tpu_custom_call.1} parent=11 // pred_check
          %p148 = pneg %p86
        $region14: #{tpu_custom_call.1} parent=11 // pred_check_branch
          %150 = sbr.rel (%p148) target = $region16
        $region15: #{tpu_custom_call.1} parent=11 // pred_region
          _
        $region16: #{tpu_custom_call.1} parent=11 // pred_fallthru
          _
        // Predicated region
        $region17: #{tpu_custom_call.1} parent=11 // pred_check
          %p151 = pneg %p107
        $region18: #{tpu_custom_call.1} parent=11 // pred_check_branch
          %153 = sbr.rel (%p151) target = $region20
        $region19: #{tpu_custom_call.1} parent=11 // pred_region
          _
        $region20: #{tpu_custom_call.1} parent=11 // pred_fallthru
          _
      $region12: #{tpu_custom_call.1} parent=5 // pred_fallthru
        _
      %p154 = scmp.lt.s32.totalorder %s13, 2
      // Predicated region
      $region21: #{tpu_custom_call.1} parent=5 // pred_check
        %p155 = pneg %p154
      $region22: #{tpu_custom_call.1} parent=5 // pred_check_branch
        %157 = sbr.rel (%p155) target = $region24
      $region23: #{tpu_custom_call.1} parent=5 // pred_region
        // Predicated region
        $region25: #{tpu_custom_call.1} parent=23 // pred_check
          %p158 = pneg %p33
        $region26: #{tpu_custom_call.1} parent=23 // pred_check_branch
          %160 = sbr.rel (%p158) target = $region28
        $region27: #{tpu_custom_call.1} parent=23 // pred_region
          %p161 = scmp.lt.s32.totalorder %s13, 1
          %s162 = scalar_select %p161, %s13, 1
          %s163 = smul.addr %s162, 4
          %s164 = scalar_lea.vmem %s0, %s163
        $region28: #{tpu_custom_call.1} parent=23 // pred_fallthru
          _
        // Predicated region
        $region29: #{tpu_custom_call.1} parent=23 // pred_check
          %p165 = pneg %p59
        $region30: #{tpu_custom_call.1} parent=23 // pred_check_branch
          %167 = sbr.rel (%p165) target = $region32
        $region31: #{tpu_custom_call.1} parent=23 // pred_region
          %p168 = scmp.lt.s32.totalorder %s13, 1
          %s169 = scalar_select %p168, %s13, 1
          %s170 = smul.addr %s169, 2
          %s171 = smul.addr %s170, 4
          %s172 = scalar_lea.vmem %s1, %s171
        $region32: #{tpu_custom_call.1} parent=23 // pred_fallthru
          _
      $region24: #{tpu_custom_call.1} parent=5 // pred_fallthru
        _
      %p173 = scmp.le.s32.totalorder 1, %s13
      %p174 = scmp.lt.s32.totalorder %s13, 3
      %p175 = pnand %p173, %p174
      %p176 = pneg %p175
      // Predicated region
      $region33: #{tpu_custom_call.1} parent=5 // pred_check
        _
      $region34: #{tpu_custom_call.1} parent=5 // pred_check_branch
        %178 = sbr.rel (%p175) target = $region36
      $region35: #{tpu_custom_call.1} parent=5 // pred_region
        %s179 = ssub.s32 %s13, 1
        %p180 = scmp.lt.s32.totalorder %s18, 1
        %s181 = scalar_select %p180, %s18, 1
        %s182 = smul.addr %s181, 4
        %s183 = scalar_lea.vmem %s0, %s182
        %p184 = pneg %p39
        %p185 = pneg %p36
        %p186 = scmp.lt.s32.totalorder %s18, 1
        %s187 = scalar_select %p186, %s18, 1
        %s188 = smul.addr %s187, 2
        %s189 = smul.addr %s188, 4
        %s190 = scalar_lea.vmem %s1, %s189
        %p191 = pneg %p65
        %p192 = pneg %p62
        %p193 = pneg %p86
        %p194 = pneg %p83
        %p195 = pneg %p107
        %p196 = pneg %p104
        %p197 = pneg %p133
        %p198 = pneg %p130
        %s199 = sand.u32 %s120, 1
        %s200 = scalar_lea.sflag [#allocation3], %s199
        %s201 = sand.u32 %s120, 1
        %s202 = smul.addr %s201, 8
        %s203 = scalar_lea.vmem [#allocation2], %s202
        %p204 = scmp.lt.s32.totalorder %s18, 1
        %s205 = scalar_select %p204, %s18, 1
        %s206 = smul.addr %s205, 4
        %s207 = scalar_lea.vmem %s0, %s206
        %p208 = scmp.lt.s32.totalorder %s18, 1
        %s209 = scalar_select %p208, %s18, 1
        %s210 = smul.addr %s209, 2
        %s211 = smul.addr %s210, 4
        %s212 = scalar_lea.vmem %s1, %s211
        %v214 = vld [vmem:[%s207] sm:$0xf]
        %v215 = vld [vmem:[%s212] sm:$0xf]
        %v216 = vld [vmem:[%s212 + $0x4] sm:$0xf]
        %v217 = vld [vmem:[%s2] sm:$0xf]
        %v218 = vld [vmem:[%s2 + $0x4] sm:$0xf]
        %v219 = vld [vmem:[%s3] sm:$0xff]
        %v220 = vld [vmem:[%s3 + $0x8] sm:$0xff]
        %222 = vset.pattern.permute.xlu0 0
        %223 = vperm.xlu0 %222, %v219
        %v224 = vpop.permute.xlu0 %223
        %227 = vset.pattern.permute.xlu0 0
        %228 = vperm.xlu0 %227, %v220
        %v229 = vpop.permute.xlu0 %228
        %v233 = vunpack.c.l.b16 %v217
        %v234 = vunpack.c.l.b16 %v218
        %v235 = vpack.c.b16 %v234, %v233
        %vm236 = vcmask 64512
        %v238 = vsel %vm236, %v235, 0
        %vm240 = vcmask 1043456
        %v242 = vsel %vm240, %v214, 0
        %244 = vmatprep.subr.bf16.mxu0 0
        %245 = vmatpush1.bf16.msra.mxu0 %v242
        %246 = vmatprep.subr.bf16.mxu0 0
        %247 = vmatpush1.bf16.msra.mxu0 0
        %248 = vmatprep.subr.bf16.mxu0 0
        %249 = vmatpush1.bf16.msra.mxu0 0
        %250 = vmatprep.subr.bf16.mxu0 0
        %251 = vmatpush1.bf16.msra.mxu0 0
        %252 = vmatprep.subr.bf16.mxu0 0
        %253 = vmatpush1.bf16.msra.mxu0 0
        %254 = vmatprep.subr.bf16.mxu0 0
        %255 = vmatpush1.bf16.msra.mxu0 0
        %256 = vmatprep.subr.bf16.mxu0 0
        %257 = vmatpush1.bf16.msra.mxu0 0
        %258 = vmatprep.subr.bf16.mxu0 0
        %259 = vmatpush1.bf16.msra.mxu0 0
        %260 = vmatprep.subr.bf16.mxu0 0
        %261 = vmatpush1.bf16.msra.mxu0 0
        %262 = vmatprep.subr.bf16.mxu0 0
        %263 = vmatpush1.bf16.msra.mxu0 0
        %264 = vmatprep.subr.bf16.mxu0 0
        %265 = vmatpush1.bf16.msra.mxu0 0
        %266 = vmatprep.subr.bf16.mxu0 0
        %267 = vmatpush1.bf16.msra.mxu0 0
        %268 = vmatprep.subr.bf16.mxu0 0
        %269 = vmatpush1.bf16.msra.mxu0 0
        %270 = vmatprep.subr.bf16.mxu0 0
        %271 = vmatpush1.bf16.msra.mxu0 0
        %272 = vmatprep.subr.bf16.mxu0 0
        %273 = vmatpush1.bf16.msra.mxu0 0
        %274 = vmatprep.subr.bf16.mxu0 0
        %275 = vmatpush1.bf16.msra.mxu0 0
        %276 = vmatprep.mubr.bf16.mxu0 0
        %277 = vmatmul.mubr.bf16.gmra.mrb[0].mxu0 %v238
        %v278 = vpop.f32.mrb[0].mxu0
        %v279 = vadd.f32 %v224, %v278
        %v280 = vpop.f32.mrb[0].mxu0
        %v281 = vpop.f32.mrb[0].mxu0
        %v282 = vadd.f32 %v229, %v281
        %v283 = vpop.f32.mrb[0].mxu0
        %284 = vdwg.mxu0
        %vm285 = vcmp.gt.f32.partialorder %v279, 0.0
        %vm286 = vcmp.gt.f32.partialorder %v282, 0.0
        %v287 = vmul.f32 %v279, 0.01
        %v288 = vmul.f32 %v282, 0.01
        %v289 = vsel %vm285, %v279, %v287
        %v290 = vsel %vm286, %v282, %v288
        %v291 = vld [vmem:[%s2 + $0x8] sm:$0xf]
        %v292 = vld [vmem:[%s2 + $0xc] sm:$0xf]
        %v293 = vpack.c.bf16 %v290, %v289
        %v294 = vld [vmem:[%s3 + $0x10] sm:$0xff]
        %v295 = vld [vmem:[%s3 + $0x18] sm:$0xff]
        %297 = vset.pattern.permute.xlu0 0
        %298 = vperm.xlu0 %297, %v294
        %v299 = vpop.permute.xlu0 %298
        %302 = vset.pattern.permute.xlu0 0
        %303 = vperm.xlu0 %302, %v295
        %v304 = vpop.permute.xlu0 %303
        %v308 = vunpack.c.l.b16 %v291
        %v309 = vunpack.c.l.b16 %v292
        %v310 = vpack.c.b16 %v309, %v308
        %vm311 = vcmask 130048
        %v313 = vsel %vm311, %v310, 0
        %315 = vmatprep.subr.bf16.mxu0 0
        %316 = vmatpush1.bf16.msra.mxu0 %v293
        %317 = vmatprep.subr.bf16.mxu0 0
        %318 = vmatpush1.bf16.msra.mxu0 0
        %319 = vmatprep.subr.bf16.mxu0 0
        %320 = vmatpush1.bf16.msra.mxu0 0
        %321 = vmatprep.subr.bf16.mxu0 0
        %322 = vmatpush1.bf16.msra.mxu0 0
        %323 = vmatprep.subr.bf16.mxu0 0
        %324 = vmatpush1.bf16.msra.mxu0 0
        %325 = vmatprep.subr.bf16.mxu0 0
        %326 = vmatpush1.bf16.msra.mxu0 0
        %327 = vmatprep.subr.bf16.mxu0 0
        %328 = vmatpush1.bf16.msra.mxu0 0
        %329 = vmatprep.subr.bf16.mxu0 0
        %330 = vmatpush1.bf16.msra.mxu0 0
        %331 = vmatprep.subr.bf16.mxu0 0
        %332 = vmatpush1.bf16.msra.mxu0 0
        %333 = vmatprep.subr.bf16.mxu0 0
        %334 = vmatpush1.bf16.msra.mxu0 0
        %335 = vmatprep.subr.bf16.mxu0 0
        %336 = vmatpush1.bf16.msra.mxu0 0
        %337 = vmatprep.subr.bf16.mxu0 0
        %338 = vmatpush1.bf16.msra.mxu0 0
        %339 = vmatprep.subr.bf16.mxu0 0
        %340 = vmatpush1.bf16.msra.mxu0 0
        %341 = vmatprep.subr.bf16.mxu0 0
        %342 = vmatpush1.bf16.msra.mxu0 0
        %343 = vmatprep.subr.bf16.mxu0 0
        %344 = vmatpush1.bf16.msra.mxu0 0
        %345 = vmatprep.subr.bf16.mxu0 0
        %346 = vmatpush1.bf16.msra.mxu0 0
        %347 = vmatprep.mubr.bf16.mxu0 0
        %348 = vmatmul.mubr.bf16.gmra.mrb[0].mxu0 %v313
        %v349 = vpop.f32.mrb[0].mxu0
        %v350 = vadd.f32 %v299, %v349
        %v351 = vpop.f32.mrb[0].mxu0
        %v352 = vpop.f32.mrb[0].mxu0
        %v353 = vadd.f32 %v304, %v352
        %v354 = vpop.f32.mrb[0].mxu0
        %355 = vdwg.mxu0
        %v356 = vmul.f32 %v350, 0.5
        %v357 = vmul.f32 %v353, 0.5
        %v358 = vmul.f32 %v350, 0.70710677
        %v359 = vmul.f32 %v353, 0.70710677
        %v360 = verf.f32.pop %v358
        %v361 = verf.f32.pop %v359
        %v362 = vadd.f32 %v360, 1.0
        %v363 = vadd.f32 %v361, 1.0
        %v364 = vmul.f32 %v356, %v362
        %v365 = vmul.f32 %v357, %v363
        %v366 = vmul.f32 %v364, 0.35355338
        %v367 = vmul.f32 %v365, 0.35355338
        %v368 = vld [vmem:[%s2 + $0x10] sm:$0xf]
        %v369 = vld [vmem:[%s2 + $0x14] sm:$0xf]
        %v370 = vld [vmem:[%s2 + $0x18] sm:$0xf]
        %v371 = vld [vmem:[%s2 + $0x1c] sm:$0xf]
        %v372 = vld [vmem:[%s3 + $0x20] sm:$0xff]
        %v373 = vld [vmem:[%s3 + $0x28] sm:$0xff]
        %v374 = vld [vmem:[%s3 + $0x30] sm:$0xff]
        %v375 = vld [vmem:[%s3 + $0x38] sm:$0xff]
        %377 = vset.pattern.permute.xlu0 0
        %378 = vperm.xlu0 %377, %v372
        %v379 = vpop.permute.xlu0 %378
        %382 = vset.pattern.permute.xlu0 0
        %383 = vperm.xlu0 %382, %v373
        %v384 = vpop.permute.xlu0 %383
        %387 = vset.pattern.permute.xlu0 0
        %388 = vperm.xlu0 %387, %v374
        %v389 = vpop.permute.xlu0 %388
        %392 = vset.pattern.permute.xlu0 0
        %393 = vperm.xlu0 %392, %v375
        %v394 = vpop.permute.xlu0 %393
        %v400 = vunpack.c.l.b16 %v368
        %v401 = vunpack.c.l.b16 %v369
        %v402 = vunpack.c.l.b16 %v370
        %v403 = vunpack.c.l.b16 %v371
        %v404 = vpack.c.b16 %v401, %v400
        %v405 = vpack.c.b16 %v403, %v402
        %v408 = vunpack.c.l.b16 %v215
        %v409 = vunpack.c.l.b16 %v216
        %v410 = vpack.c.b16 %v409, %v408
        %v413 = vsel %vm311, %v404, 0
        %v416 = vsel %vm311, %v405, 0
        %418 = vmatprep.subr.bf16.mxu0 0
        %419 = vmatpush1.bf16.msra.mxu0 %v410
        %420 = vmatprep.subr.bf16.mxu0 0
        %421 = vmatpush1.bf16.msra.mxu0 0
        %422 = vmatprep.subr.bf16.mxu0 0
        %423 = vmatpush1.bf16.msra.mxu0 0
        %424 = vmatprep.subr.bf16.mxu0 0
        %425 = vmatpush1.bf16.msra.mxu0 0
        %426 = vmatprep.subr.bf16.mxu0 0
        %427 = vmatpush1.bf16.msra.mxu0 0
        %428 = vmatprep.subr.bf16.mxu0 0
        %429 = vmatpush1.bf16.msra.mxu0 0
        %430 = vmatprep.subr.bf16.mxu0 0
        %431 = vmatpush1.bf16.msra.mxu0 0
        %432 = vmatprep.subr.bf16.mxu0 0
        %433 = vmatpush1.bf16.msra.mxu0 0
        %434 = vmatprep.subr.bf16.mxu0 0
        %435 = vmatpush1.bf16.msra.mxu0 0
        %436 = vmatprep.subr.bf16.mxu0 0
        %437 = vmatpush1.bf16.msra.mxu0 0
        %438 = vmatprep.subr.bf16.mxu0 0
        %439 = vmatpush1.bf16.msra.mxu0 0
        %440 = vmatprep.subr.bf16.mxu0 0
        %441 = vmatpush1.bf16.msra.mxu0 0
        %442 = vmatprep.subr.bf16.mxu0 0
        %443 = vmatpush1.bf16.msra.mxu0 0
        %444 = vmatprep.subr.bf16.mxu0 0
        %445 = vmatpush1.bf16.msra.mxu0 0
        %446 = vmatprep.subr.bf16.mxu0 0
        %447 = vmatpush1.bf16.msra.mxu0 0
        %448 = vmatprep.subr.bf16.mxu0 0
        %449 = vmatpush1.bf16.msra.mxu0 0
        %450 = vmatprep.mubr.bf16.mxu0 0
        %451 = vmatmul.mubr.bf16.gmra.mrb[0].mxu0 %v413
        %v452 = vpop.f32.mrb[0].mxu0
        %v453 = vadd.f32 %v379, %v452
        %v454 = vpop.f32.mrb[0].mxu0
        %v455 = vpop.f32.mrb[0].mxu0
        %v456 = vadd.f32 %v384, %v455
        %v457 = vpop.f32.mrb[0].mxu0
        %458 = vmatprep.mubr.bf16.mxu0 0
        %459 = vmatmul.mubr.bf16.gmra.mrb[0].mxu0 %v416
        %v460 = vpop.f32.mrb[0].mxu0
        %v461 = vadd.f32 %v389, %v460
        %v462 = vpop.f32.mrb[0].mxu0
        %v463 = vpop.f32.mrb[0].mxu0
        %v464 = vadd.f32 %v394, %v463
        %v465 = vpop.f32.mrb[0].mxu0
        %466 = vdwg.mxu0
        %vm467 = vcmp.gt.f32.partialorder %v453, 0.0
        %vm468 = vcmp.gt.f32.partialorder %v456, 0.0
        %vm469 = vcmp.gt.f32.partialorder %v461, 0.0
        %vm470 = vcmp.gt.f32.partialorder %v464, 0.0
        %v471 = vmul.f32 %v453, 0.01
        %v472 = vmul.f32 %v456, 0.01
        %v473 = vmul.f32 %v461, 0.01
        %v474 = vmul.f32 %v464, 0.01
        %v475 = vsel %vm467, %v453, %v471
        %v476 = vsel %vm468, %v456, %v472
        %v477 = vsel %vm469, %v461, %v473
        %v478 = vsel %vm470, %v464, %v474
        %v479 = vld [vmem:[%s2 + $0x20] sm:$0xf]
        %v480 = vld [vmem:[%s2 + $0x24] sm:$0xf]
        %v481 = vpack.c.bf16 %v476, %v475
        %v482 = vpack.c.bf16 %v478, %v477
        %v483 = vld [vmem:[%s3 + $0x40] sm:$0xff]
        %v484 = vld [vmem:[%s3 + $0x48] sm:$0xff]
        %486 = vset.pattern.permute.xlu0 0
        %487 = vperm.xlu0 %486, %v483
        %v488 = vpop.permute.xlu0 %487
        %491 = vset.pattern.permute.xlu0 0
        %492 = vperm.xlu0 %491, %v484
        %v493 = vpop.permute.xlu0 %492
        %v497 = vunpack.c.l.b16 %v479
        %v498 = vunpack.c.l.b16 %v480
        %v499 = vpack.c.b16 %v498, %v497
        %vm500 = vcmask 261120
        %v502 = vsel %vm500, %v499, 0
        %504 = vmatprep.subr.bf16.mxu0 0
        %505 = vmatpush1.bf16.msra.mxu0 %v481
        %506 = vmatprep.subr.bf16.mxu0 0
        %507 = vmatpush1.bf16.msra.mxu0 %v482
        %508 = vmatprep.subr.bf16.mxu0 0
        %509 = vmatpush1.bf16.msra.mxu0 0
        %510 = vmatprep.subr.bf16.mxu0 0
        %511 = vmatpush1.bf16.msra.mxu0 0
        %512 = vmatprep.subr.bf16.mxu0 0
        %513 = vmatpush1.bf16.msra.mxu0 0
        %514 = vmatprep.subr.bf16.mxu0 0
        %515 = vmatpush1.bf16.msra.mxu0 0
        %516 = vmatprep.subr.bf16.mxu0 0
        %517 = vmatpush1.bf16.msra.mxu0 0
        %518 = vmatprep.subr.bf16.mxu0 0
        %519 = vmatpush1.bf16.msra.mxu0 0
        %520 = vmatprep.subr.bf16.mxu0 0
        %521 = vmatpush1.bf16.msra.mxu0 0
        %522 = vmatprep.subr.bf16.mxu0 0
        %523 = vmatpush1.bf16.msra.mxu0 0
        %524 = vmatprep.subr.bf16.mxu0 0
        %525 = vmatpush1.bf16.msra.mxu0 0
        %526 = vmatprep.subr.bf16.mxu0 0
        %527 = vmatpush1.bf16.msra.mxu0 0
        %528 = vmatprep.subr.bf16.mxu0 0
        %529 = vmatpush1.bf16.msra.mxu0 0
        %530 = vmatprep.subr.bf16.mxu0 0
        %531 = vmatpush1.bf16.msra.mxu0 0
        %532 = vmatprep.subr.bf16.mxu0 0
        %533 = vmatpush1.bf16.msra.mxu0 0
        %534 = vmatprep.subr.bf16.mxu0 0
        %535 = vmatpush1.bf16.msra.mxu0 0
        %536 = vmatprep.mubr.bf16.mxu0 0
        %537 = vmatmul.mubr.bf16.gmra.mrb[0].mxu0 %v502
        %v538 = vpop.f32.mrb[0].mxu0
        %v539 = vadd.f32 %v488, %v538
        %v540 = vpop.f32.mrb[0].mxu0
        %v541 = vpop.f32.mrb[0].mxu0
        %v542 = vadd.f32 %v493, %v541
        %v543 = vpop.f32.mrb[0].mxu0
        %544 = vdwg.mxu0
        %v545 = vmul.f32 %v539, 0.5
        %v546 = vmul.f32 %v542, 0.5
        %v547 = vmul.f32 %v539, 0.70710677
        %v548 = vmul.f32 %v542, 0.70710677
        %v549 = verf.f32.pop %v547
        %v550 = verf.f32.pop %v548
        %v551 = vadd.f32 %v549, 1.0
        %v552 = vadd.f32 %v550, 1.0
        %v553 = vmul.f32 %v545, %v551
        %v554 = vmul.f32 %v546, %v552
        %555 = vxpose.xlu0.b32.start [1/16] %v366, 128
        %556 = vxpose.xlu0.b32.cont [2/16] 0.0, 128
        %557 = vxpose.xlu0.b32.cont [3/16] 0.0, 128
        %558 = vxpose.xlu0.b32.cont [4/16] 0.0, 128
        %559 = vxpose.xlu0.b32.cont [5/16] 0.0, 128
        %560 = vxpose.xlu0.b32.cont [6/16] 0.0, 128
        %561 = vxpose.xlu0.b32.cont [7/16] 0.0, 128
        %562 = vxpose.xlu0.b32.cont [8/16] 0.0, 128
        %563 = vxpose.xlu0.b32.cont [9/16] 0.0, 128
        %564 = vxpose.xlu0.b32.cont [10/16] 0.0, 128
        %565 = vxpose.xlu0.b32.cont [11/16] 0.0, 128
        %566 = vxpose.xlu0.b32.cont [12/16] 0.0, 128
        %567 = vxpose.xlu0.b32.cont [13/16] 0.0, 128
        %568 = vxpose.xlu0.b32.cont [14/16] 0.0, 128
        %569 = vxpose.xlu0.b32.cont [15/16] 0.0, 128
        %570 = vxpose.xlu0.b32.end [16/16] 0.0, 128
        %v571 = vpop.trf.xlu0
        %v572 = vpop.trf.xlu0
        %v573 = vpop.trf.xlu0
        %v574 = vpop.trf.xlu0
        %v575 = vpop.trf.xlu0
        %v576 = vpop.trf.xlu0
        %v577 = vpop.trf.xlu0
        %v578 = vpop.trf.xlu0
        %v579 = vpop.trf.xlu0
        %v580 = vpop.trf.xlu0
        %v581 = vpop.trf.xlu0
        %v582 = vpop.trf.xlu0
        %v583 = vpop.trf.xlu0
        %v584 = vpop.trf.xlu0
        %v585 = vpop.trf.xlu0
        %v586 = vpop.trf.xlu0
        %v587 = vpack.c.bf16 %v572, %v571
        %v588 = vpack.c.bf16 %v574, %v573
        %v589 = vpack.c.bf16 %v576, %v575
        %v590 = vpack.c.bf16 %v578, %v577
        %v591 = vpack.c.bf16 %v553, %v553
        %v592 = vpack.c.bf16 %v554, %v554
        %v594 = vsel %vm236, %v587, 0
        %v597 = vsel %vm236, %v588, 0
        %v600 = vsel %vm236, %v589, 0
        %v603 = vsel %vm236, %v590, 0
        %v606 = vsel %vm240, %v591, 0
        %608 = vmatprep.subr.bf16.mxu0 0
        %609 = vmatpush1.bf16.msra.mxu0 %v606
        %610 = vmatprep.subr.bf16.mxu0 0
        %611 = vmatpush1.bf16.msra.mxu0 0
        %612 = vmatprep.subr.bf16.mxu0 0
        %613 = vmatpush1.bf16.msra.mxu0 0
        %614 = vmatprep.subr.bf16.mxu0 0
        %615 = vmatpush1.bf16.msra.mxu0 0
        %616 = vmatprep.subr.bf16.mxu0 0
        %617 = vmatpush1.bf16.msra.mxu0 0
        %618 = vmatprep.subr.bf16.mxu0 0
        %619 = vmatpush1.bf16.msra.mxu0 0
        %620 = vmatprep.subr.bf16.mxu0 0
        %621 = vmatpush1.bf16.msra.mxu0 0
        %622 = vmatprep.subr.bf16.mxu0 0
        %623 = vmatpush1.bf16.msra.mxu0 0
        %624 = vmatprep.subr.bf16.mxu0 0
        %625 = vmatpush1.bf16.msra.mxu0 0
        %626 = vmatprep.subr.bf16.mxu0 0
        %627 = vmatpush1.bf16.msra.mxu0 0
        %628 = vmatprep.subr.bf16.mxu0 0
        %629 = vmatpush1.bf16.msra.mxu0 0
        %630 = vmatprep.subr.bf16.mxu0 0
        %631 = vmatpush1.bf16.msra.mxu0 0
        %632 = vmatprep.subr.bf16.mxu0 0
        %633 = vmatpush1.bf16.msra.mxu0 0
        %634 = vmatprep.subr.bf16.mxu0 0
        %635 = vmatpush1.bf16.msra.mxu0 0
        %636 = vmatprep.subr.bf16.mxu0 0
        %637 = vmatpush1.bf16.msra.mxu0 0
        %638 = vmatprep.subr.bf16.mxu0 0
        %639 = vmatpush1.bf16.msra.mxu0 0
        %640 = vmatprep.mubr.bf16.mxu0 0
        %641 = vmatmul.mubr.bf16.gmra.mrb[0].mxu0 %v594
        %v642 = vpop.f32.mrb[0].mxu0
        %v643 = vadd.f32 0.0, %v642
        %v644 = vpop.f32.mrb[0].mxu0
        %v645 = vpop.f32.mrb[0].mxu0
        %v646 = vadd.f32 0.0, %v645
        %v647 = vpop.f32.mrb[0].mxu0
        %648 = vmatprep.mubr.bf16.mxu0 0
        %649 = vmatmul.mubr.bf16.gmra.mrb[0].mxu0 %v597
        %v650 = vpop.f32.mrb[0].mxu0
        %v651 = vadd.f32 0.0, %v650
        %v652 = vpop.f32.mrb[0].mxu0
        %v653 = vpop.f32.mrb[0].mxu0
        %v654 = vadd.f32 0.0, %v653
        %v655 = vpop.f32.mrb[0].mxu0
        %656 = vmatprep.mubr.bf16.mxu0 0
        %657 = vmatmul.mubr.bf16.gmra.mrb[0].mxu0 %v600
        %v658 = vpop.f32.mrb[0].mxu0
        %v659 = vadd.f32 0.0, %v658
        %v660 = vpop.f32.mrb[0].mxu0
        %v661 = vpop.f32.mrb[0].mxu0
        %v662 = vadd.f32 0.0, %v661
        %v663 = vpop.f32.mrb[0].mxu0
        %664 = vmatprep.mubr.bf16.mxu0 0
        %665 = vmatmul.mubr.bf16.gmra.mrb[0].mxu0 %v603
        %v666 = vpop.f32.mrb[0].mxu0
        %v667 = vadd.f32 0.0, %v666
        %v668 = vpop.f32.mrb[0].mxu0
        %v669 = vpop.f32.mrb[0].mxu0
        %v670 = vadd.f32 0.0, %v669
        %v671 = vpop.f32.mrb[0].mxu0
        %672 = vdwg.mxu0
        %v673 = vsel %vm500, %v643, -inf
        %674 = vmax.xlane.f32.xlu0 %v673
        %v675 = vpop.xlane.xlu0 %674
        %v676 = vsel %vm500, %v646, -inf
        %677 = vmax.xlane.f32.xlu0 %v676
        %v678 = vpop.xlane.xlu0 %677
        %v679 = vsel %vm500, %v651, -inf
        %680 = vmax.xlane.f32.xlu0 %v679
        %v681 = vpop.xlane.xlu0 %680
        %v682 = vsel %vm500, %v654, -inf
        %683 = vmax.xlane.f32.xlu0 %v682
        %v684 = vpop.xlane.xlu0 %683
        %v685 = vsel %vm500, %v659, -inf
        %686 = vmax.xlane.f32.xlu0 %v685
        %v687 = vpop.xlane.xlu0 %686
        %v688 = vsel %vm500, %v662, -inf
        %689 = vmax.xlane.f32.xlu0 %v688
        %v690 = vpop.xlane.xlu0 %689
        %v691 = vsel %vm500, %v667, -inf
        %692 = vmax.xlane.f32.xlu0 %v691
        %v693 = vpop.xlane.xlu0 %692
        %v694 = vsel %vm500, %v670, -inf
        %695 = vmax.xlane.f32.xlu0 %v694
        %v696 = vpop.xlane.xlu0 %695
        %v697 = vsub.f32 %v643, %v675
        %v698 = vsub.f32 %v646, %v678
        %v699 = vsub.f32 %v651, %v681
        %v700 = vsub.f32 %v654, %v684
        %v701 = vsub.f32 %v659, %v687
        %v702 = vsub.f32 %v662, %v690
        %v703 = vsub.f32 %v667, %v693
        %v704 = vsub.f32 %v670, %v696
        %v705 = vmul.f32 %v697, 1.442695
        %v706 = vpow.pop %v705
        %v707 = vmul.f32 %v698, 1.442695
        %v708 = vpow.pop %v707
        %v709 = vmul.f32 %v699, 1.442695
        %v710 = vpow.pop %v709
        %v711 = vmul.f32 %v700, 1.442695
        %v712 = vpow.pop %v711
        %v713 = vmul.f32 %v701, 1.442695
        %v714 = vpow.pop %v713
        %v715 = vmul.f32 %v702, 1.442695
        %v716 = vpow.pop %v715
        %v717 = vmul.f32 %v703, 1.442695
        %v718 = vpow.pop %v717
        %v719 = vmul.f32 %v704, 1.442695
        %v720 = vpow.pop %v719
        %v721 = vsel %vm500, %v706, 0.0
        %722 = vadd.xlane.f32.xlu0 %v721
        %v723 = vpop.xlane.xlu0 %722
        %v724 = vsel %vm500, %v708, 0.0
        %725 = vadd.xlane.f32.xlu0 %v724
        %v726 = vpop.xlane.xlu0 %725
        %v727 = vsel %vm500, %v710, 0.0
        %728 = vadd.xlane.f32.xlu0 %v727
        %v729 = vpop.xlane.xlu0 %728
        %v730 = vsel %vm500, %v712, 0.0
        %731 = vadd.xlane.f32.xlu0 %v730
        %v732 = vpop.xlane.xlu0 %731
        %v733 = vsel %vm500, %v714, 0.0
        %734 = vadd.xlane.f32.xlu0 %v733
        %v735 = vpop.xlane.xlu0 %734
        %v736 = vsel %vm500, %v716, 0.0
        %737 = vadd.xlane.f32.xlu0 %v736
        %v738 = vpop.xlane.xlu0 %737
        %v739 = vsel %vm500, %v718, 0.0
        %740 = vadd.xlane.f32.xlu0 %v739
        %v741 = vpop.xlane.xlu0 %740
        %v742 = vsel %vm500, %v720, 0.0
        %743 = vadd.xlane.f32.xlu0 %v742
        %v744 = vpop.xlane.xlu0 %743
        %v745 = vrcp.pop %v723
        %v746 = vrcp.pop %v726
        %v747 = vrcp.pop %v729
        %v748 = vrcp.pop %v732
        %v749 = vrcp.pop %v735
        %v750 = vrcp.pop %v738
        %v751 = vrcp.pop %v741
        %v752 = vrcp.pop %v744
        %v753 = vmul.f32 %v706, %v745
        %v754 = vmul.f32 %v708, %v746
        %v755 = vmul.f32 %v710, %v747
        %v756 = vmul.f32 %v712, %v748
        %v757 = vmul.f32 %v714, %v749
        %v758 = vmul.f32 %v716, %v750
        %v759 = vmul.f32 %v718, %v751
        %v760 = vmul.f32 %v720, %v752
        %v761 = vpack.c.bf16 %v754, %v753
        %v762 = vpack.c.bf16 %v756, %v755
        %v763 = vpack.c.bf16 %v758, %v757
        %v764 = vpack.c.bf16 %v760, %v759
        %v766 = vsel %vm500, %v592, 0
        %v769 = vsel %vm500, %v761, 0
        %v772 = vsel %vm500, %v762, 0
        %v775 = vsel %vm500, %v763, 0
        %v778 = vsel %vm500, %v764, 0
        %780 = vmatprep.subr.bf16.mxu0 0
        %781 = vmatpush1.bf16.xpose.msra.mxu0 %v769
        %782 = vmatprep.subr.bf16.mxu0 0
        %783 = vmatpush1.bf16.xpose.msra.mxu0 %v772
        %784 = vmatprep.subr.bf16.mxu0 0
        %785 = vmatpush1.bf16.xpose.msra.mxu0 %v775
        %786 = vmatprep.subr.bf16.mxu0 0
        %787 = vmatpush1.bf16.xpose.msra.mxu0 %v778
        %788 = vmatprep.subr.bf16.mxu0 0
        %789 = vmatpush1.bf16.xpose.msra.mxu0 0
        %790 = vmatprep.subr.bf16.mxu0 0
        %791 = vmatpush1.bf16.xpose.msra.mxu0 0
        %792 = vmatprep.subr.bf16.mxu0 0
        %793 = vmatpush1.bf16.xpose.msra.mxu0 0
        %794 = vmatprep.subr.bf16.mxu0 0
        %795 = vmatpush1.bf16.xpose.msra.mxu0 0
        %796 = vmatprep.subr.bf16.mxu0 0
        %797 = vmatpush1.bf16.xpose.msra.mxu0 0
        %798 = vmatprep.subr.bf16.mxu0 0
        %799 = vmatpush1.bf16.xpose.msra.mxu0 0
        %800 = vmatprep.subr.bf16.mxu0 0
        %801 = vmatpush1.bf16.xpose.msra.mxu0 0
        %802 = vmatprep.subr.bf16.mxu0 0
        %803 = vmatpush1.bf16.xpose.msra.mxu0 0
        %804 = vmatprep.subr.bf16.mxu0 0
        %805 = vmatpush1.bf16.xpose.msra.mxu0 0
        %806 = vmatprep.subr.bf16.mxu0 0
        %807 = vmatpush1.bf16.xpose.msra.mxu0 0
        %808 = vmatprep.subr.bf16.mxu0 0
        %809 = vmatpush1.bf16.xpose.msra.mxu0 0
        %810 = vmatprep.subr.bf16.mxu0 0
        %811 = vmatpush1.bf16.xpose.msra.mxu0 0
        %812 = vmatprep.mubr.bf16.mxu0 0
        %813 = vmatmul.mubr.bf16.gmra.mrb[0].mxu0 %v766
        %v814 = vpop.f32.mrb[0].mxu0
        %v815 = vadd.f32 0.0, %v814
        %v816 = vpop.f32.mrb[0].mxu0
        %v817 = vpop.f32.mrb[0].mxu0
        %v818 = vpop.f32.mrb[0].mxu0
        %819 = vdwg.mxu0
        %v820 = vld [vmem:[%s2 + $0x28] sm:$0xf]
        %v821 = vpack.c.bf16 %v815, %v815
        %822 = vxpose.xlu0.b32.start [1/16] %v367, 128
        %823 = vxpose.xlu0.b32.cont [2/16] 0.0, 128
        %824 = vxpose.xlu0.b32.cont [3/16] 0.0, 128
        %825 = vxpose.xlu0.b32.cont [4/16] 0.0, 128
        %826 = vxpose.xlu0.b32.cont [5/16] 0.0, 128
        %827 = vxpose.xlu0.b32.cont [6/16] 0.0, 128
        %828 = vxpose.xlu0.b32.cont [7/16] 0.0, 128
        %829 = vxpose.xlu0.b32.cont [8/16] 0.0, 128
        %830 = vxpose.xlu0.b32.cont [9/16] 0.0, 128
        %831 = vxpose.xlu0.b32.cont [10/16] 0.0, 128
        %832 = vxpose.xlu0.b32.cont [11/16] 0.0, 128
        %833 = vxpose.xlu0.b32.cont [12/16] 0.0, 128
        %834 = vxpose.xlu0.b32.cont [13/16] 0.0, 128
        %835 = vxpose.xlu0.b32.cont [14/16] 0.0, 128
        %836 = vxpose.xlu0.b32.cont [15/16] 0.0, 128
        %837 = vxpose.xlu0.b32.end [16/16] 0.0, 128
        %v838 = vpop.trf.xlu0
        %v839 = vpop.trf.xlu0
        %v840 = vpop.trf.xlu0
        %v841 = vpop.trf.xlu0
        %v842 = vpop.trf.xlu0
        %v843 = vpop.trf.xlu0
        %v844 = vpop.trf.xlu0
        %v845 = vpop.trf.xlu0
        %v846 = vpop.trf.xlu0
        %v847 = vpop.trf.xlu0
        %v848 = vpop.trf.xlu0
        %v849 = vpop.trf.xlu0
        %v850 = vpop.trf.xlu0
        %v851 = vpop.trf.xlu0
        %v852 = vpop.trf.xlu0
        %v853 = vpop.trf.xlu0
        %v854 = vpack.c.bf16 %v839, %v838
        %v855 = vpack.c.bf16 %v841, %v840
        %v856 = vpack.c.bf16 %v843, %v842
        %v857 = vpack.c.bf16 %v845, %v844
        %859 = vrot.lane.b32.xlu0 %v591, 96
        %v860 = vpop.permute.xlu0 %859
        %v862 = vsel %vm236, %v854, 0
        %v865 = vsel %vm236, %v855, 0
        %v868 = vsel %vm236, %v856, 0
        %v871 = vsel %vm236, %v857, 0
        %v874 = vsel %vm240, %v860, 0
        %876 = vmatprep.subr.bf16.mxu0 0
        %877 = vmatpush1.bf16.msra.mxu0 %v874
        %878 = vmatprep.subr.bf16.mxu0 0
        %879 = vmatpush1.bf16.msra.mxu0 0
        %880 = vmatprep.subr.bf16.mxu0 0
        %881 = vmatpush1.bf16.msra.mxu0 0
        %882 = vmatprep.subr.bf16.mxu0 0
        %883 = vmatpush1.bf16.msra.mxu0 0
        %884 = vmatprep.subr.bf16.mxu0 0
        %885 = vmatpush1.bf16.msra.mxu0 0
        %886 = vmatprep.subr.bf16.mxu0 0
        %887 = vmatpush1.bf16.msra.mxu0 0
        %888 = vmatprep.subr.bf16.mxu0 0
        %889 = vmatpush1.bf16.msra.mxu0 0
        %890 = vmatprep.subr.bf16.mxu0 0
        %891 = vmatpush1.bf16.msra.mxu0 0
        %892 = vmatprep.subr.bf16.mxu0 0
        %893 = vmatpush1.bf16.msra.mxu0 0
        %894 = vmatprep.subr.bf16.mxu0 0
        %895 = vmatpush1.bf16.msra.mxu0 0
        %896 = vmatprep.subr.bf16.mxu0 0
        %897 = vmatpush1.bf16.msra.mxu0 0
        %898 = vmatprep.subr.bf16.mxu0 0
        %899 = vmatpush1.bf16.msra.mxu0 0
        %900 = vmatprep.subr.bf16.mxu0 0
        %901 = vmatpush1.bf16.msra.mxu0 0
        %902 = vmatprep.subr.bf16.mxu0 0
        %903 = vmatpush1.bf16.msra.mxu0 0
        %904 = vmatprep.subr.bf16.mxu0 0
        %905 = vmatpush1.bf16.msra.mxu0 0
        %906 = vmatprep.subr.bf16.mxu0 0
        %907 = vmatpush1.bf16.msra.mxu0 0
        %908 = vmatprep.mubr.bf16.mxu0 0
        %909 = vmatmul.mubr.bf16.gmra.mrb[0].mxu0 %v862
        %v910 = vpop.f32.mrb[0].mxu0
        %v911 = vadd.f32 0.0, %v910
        %v912 = vpop.f32.mrb[0].mxu0
        %v913 = vpop.f32.mrb[0].mxu0
        %v914 = vadd.f32 0.0, %v913
        %v915 = vpop.f32.mrb[0].mxu0
        %916 = vmatprep.mubr.bf16.mxu0 0
        %917 = vmatmul.mubr.bf16.gmra.mrb[0].mxu0 %v865
        %v918 = vpop.f32.mrb[0].mxu0
        %v919 = vadd.f32 0.0, %v918
        %v920 = vpop.f32.mrb[0].mxu0
        %v921 = vpop.f32.mrb[0].mxu0
        %v922 = vadd.f32 0.0, %v921
        %v923 = vpop.f32.mrb[0].mxu0
        %924 = vmatprep.mubr.bf16.mxu0 0
        %925 = vmatmul.mubr.bf16.gmra.mrb[0].mxu0 %v868
        %v926 = vpop.f32.mrb[0].mxu0
        %v927 = vadd.f32 0.0, %v926
        %v928 = vpop.f32.mrb[0].mxu0
        %v929 = vpop.f32.mrb[0].mxu0
        %v930 = vadd.f32 0.0, %v929
        %v931 = vpop.f32.mrb[0].mxu0
        %932 = vmatprep.mubr.bf16.mxu0 0
        %933 = vmatmul.mubr.bf16.gmra.mrb[0].mxu0 %v871
        %v934 = vpop.f32.mrb[0].mxu0
        %v935 = vadd.f32 0.0, %v934
        %v936 = vpop.f32.mrb[0].mxu0
        %v937 = vpop.f32.mrb[0].mxu0
        %v938 = vadd.f32 0.0, %v937
        %v939 = vpop.f32.mrb[0].mxu0
        %940 = vdwg.mxu0
        %v941 = vsel %vm500, %v911, -inf
        %942 = vmax.xlane.f32.xlu0 %v941
        %v943 = vpop.xlane.xlu0 %942
        %v944 = vsel %vm500, %v914, -inf
        %945 = vmax.xlane.f32.xlu0 %v944
        %v946 = vpop.xlane.xlu0 %945
        %v947 = vsel %vm500, %v919, -inf
        %948 = vmax.xlane.f32.xlu0 %v947
        %v949 = vpop.xlane.xlu0 %948
        %v950 = vsel %vm500, %v922, -inf
        %951 = vmax.xlane.f32.xlu0 %v950
        %v952 = vpop.xlane.xlu0 %951
        %v953 = vsel %vm500, %v927, -inf
        %954 = vmax.xlane.f32.xlu0 %v953
        %v955 = vpop.xlane.xlu0 %954
        %v956 = vsel %vm500, %v930, -inf
        %957 = vmax.xlane.f32.xlu0 %v956
        %v958 = vpop.xlane.xlu0 %957
        %v959 = vsel %vm500, %v935, -inf
        %960 = vmax.xlane.f32.xlu0 %v959
        %v961 = vpop.xlane.xlu0 %960
        %v962 = vsel %vm500, %v938, -inf
        %963 = vmax.xlane.f32.xlu0 %v962
        %v964 = vpop.xlane.xlu0 %963
        %v965 = vsub.f32 %v911, %v943
        %v966 = vsub.f32 %v914, %v946
        %v967 = vsub.f32 %v919, %v949
        %v968 = vsub.f32 %v922, %v952
        %v969 = vsub.f32 %v927, %v955
        %v970 = vsub.f32 %v930, %v958
        %v971 = vsub.f32 %v935, %v961
        %v972 = vsub.f32 %v938, %v964
        %v973 = vmul.f32 %v965, 1.442695
        %v974 = vpow.pop %v973
        %v975 = vmul.f32 %v966, 1.442695
        %v976 = vpow.pop %v975
        %v977 = vmul.f32 %v967, 1.442695
        %v978 = vpow.pop %v977
        %v979 = vmul.f32 %v968, 1.442695
        %v980 = vpow.pop %v979
        %v981 = vmul.f32 %v969, 1.442695
        %v982 = vpow.pop %v981
        %v983 = vmul.f32 %v970, 1.442695
        %v984 = vpow.pop %v983
        %v985 = vmul.f32 %v971, 1.442695
        %v986 = vpow.pop %v985
        %v987 = vmul.f32 %v972, 1.442695
        %v988 = vpow.pop %v987
        %v989 = vsel %vm500, %v974, 0.0
        %990 = vadd.xlane.f32.xlu0 %v989
        %v991 = vpop.xlane.xlu0 %990
        %v992 = vsel %vm500, %v976, 0.0
        %993 = vadd.xlane.f32.xlu0 %v992
        %v994 = vpop.xlane.xlu0 %993
        %v995 = vsel %vm500, %v978, 0.0
        %996 = vadd.xlane.f32.xlu0 %v995
        %v997 = vpop.xlane.xlu0 %996
        %v998 = vsel %vm500, %v980, 0.0
        %999 = vadd.xlane.f32.xlu0 %v998
        %v1000 = vpop.xlane.xlu0 %999
        %v1001 = vsel %vm500, %v982, 0.0
        %1002 = vadd.xlane.f32.xlu0 %v1001
        %v1003 = vpop.xlane.xlu0 %1002
        %v1004 = vsel %vm500, %v984, 0.0
        %1005 = vadd.xlane.f32.xlu0 %v1004
        %v1006 = vpop.xlane.xlu0 %1005
        %v1007 = vsel %vm500, %v986, 0.0
        %1008 = vadd.xlane.f32.xlu0 %v1007
        %v1009 = vpop.xlane.xlu0 %1008
        %v1010 = vsel %vm500, %v988, 0.0
        %1011 = vadd.xlane.f32.xlu0 %v1010
        %v1012 = vpop.xlane.xlu0 %1011
        %v1013 = vrcp.pop %v991
        %v1014 = vrcp.pop %v994
        %v1015 = vrcp.pop %v997
        %v1016 = vrcp.pop %v1000
        %v1017 = vrcp.pop %v1003
        %v1018 = vrcp.pop %v1006
        %v1019 = vrcp.pop %v1009
        %v1020 = vrcp.pop %v1012
        %v1021 = vmul.f32 %v974, %v1013
        %v1022 = vmul.f32 %v976, %v1014
        %v1023 = vmul.f32 %v978, %v1015
        %v1024 = vmul.f32 %v980, %v1016
        %v1025 = vmul.f32 %v982, %v1017
        %v1026 = vmul.f32 %v984, %v1018
        %v1027 = vmul.f32 %v986, %v1019
        %v1028 = vmul.f32 %v988, %v1020
        %v1029 = vpack.c.bf16 %v1022, %v1021
        %v1030 = vpack.c.bf16 %v1024, %v1023
        %v1031 = vpack.c.bf16 %v1026, %v1025
        %v1032 = vpack.c.bf16 %v1028, %v1027
        %1034 = vrot.lane.b32.xlu0 %v592, 96
        %v1035 = vpop.permute.xlu0 %1034
        %v1037 = vsel %vm500, %v1035, 0
        %v1040 = vsel %vm500, %v1029, 0
        %v1043 = vsel %vm500, %v1030, 0
        %v1046 = vsel %vm500, %v1031, 0
        %v1049 = vsel %vm500, %v1032, 0
        %1051 = vmatprep.subr.bf16.mxu0 0
        %1052 = vmatpush1.bf16.xpose.msra.mxu0 %v1040
        %1053 = vmatprep.subr.bf16.mxu0 0
        %1054 = vmatpush1.bf16.xpose.msra.mxu0 %v1043
        %1055 = vmatprep.subr.bf16.mxu0 0
        %1056 = vmatpush1.bf16.xpose.msra.mxu0 %v1046
        %1057 = vmatprep.subr.bf16.mxu0 0
        %1058 = vmatpush1.bf16.xpose.msra.mxu0 %v1049
        %1059 = vmatprep.subr.bf16.mxu0 0
        %1060 = vmatpush1.bf16.xpose.msra.mxu0 0
        %1061 = vmatprep.subr.bf16.mxu0 0
        %1062 = vmatpush1.bf16.xpose.msra.mxu0 0
        %1063 = vmatprep.subr.bf16.mxu0 0
        %1064 = vmatpush1.bf16.xpose.msra.mxu0 0
        %1065 = vmatprep.subr.bf16.mxu0 0
        %1066 = vmatpush1.bf16.xpose.msra.mxu0 0
        %1067 = vmatprep.subr.bf16.mxu0 0
        %1068 = vmatpush1.bf16.xpose.msra.mxu0 0
        %1069 = vmatprep.subr.bf16.mxu0 0
        %1070 = vmatpush1.bf16.xpose.msra.mxu0 0
        %1071 = vmatprep.subr.bf16.mxu0 0
        %1072 = vmatpush1.bf16.xpose.msra.mxu0 0
        %1073 = vmatprep.subr.bf16.mxu0 0
        %1074 = vmatpush1.bf16.xpose.msra.mxu0 0
        %1075 = vmatprep.subr.bf16.mxu0 0
        %1076 = vmatpush1.bf16.xpose.msra.mxu0 0
        %1077 = vmatprep.subr.bf16.mxu0 0
        %1078 = vmatpush1.bf16.xpose.msra.mxu0 0
        %1079 = vmatprep.subr.bf16.mxu0 0
        %1080 = vmatpush1.bf16.xpose.msra.mxu0 0
        %1081 = vmatprep.subr.bf16.mxu0 0
        %1082 = vmatpush1.bf16.xpose.msra.mxu0 0
        %1083 = vmatprep.mubr.bf16.mxu0 0
        %1084 = vmatmul.mubr.bf16.gmra.mrb[0].mxu0 %v1037
        %v1085 = vpop.f32.mrb[0].mxu0
        %v1086 = vadd.f32 0.0, %v1085
        %v1087 = vpop.f32.mrb[0].mxu0
        %v1088 = vpop.f32.mrb[0].mxu0
        %v1089 = vpop.f32.mrb[0].mxu0
        %1090 = vdwg.mxu0
        %v1091 = vld [vmem:[%s2 + $0x30] sm:$0xf]
        %v1092 = vpack.c.bf16 %v1086, %v1086
        %v1094 = vsel %vm236, %v1091, 0
        %v1097 = vsel %vm240, %v1092, 0
        %1099 = vmatprep.subr.bf16.mxu0 0
        %1100 = vmatpush1.bf16.msra.mxu0 %v1097
        %1101 = vmatprep.subr.bf16.mxu0 0
        %1102 = vmatpush1.bf16.msra.mxu0 0
        %1103 = vmatprep.subr.bf16.mxu0 0
        %1104 = vmatpush1.bf16.msra.mxu0 0
        %1105 = vmatprep.subr.bf16.mxu0 0
        %1106 = vmatpush1.bf16.msra.mxu0 0
        %1107 = vmatprep.subr.bf16.mxu0 0
        %1108 = vmatpush1.bf16.msra.mxu0 0
        %1109 = vmatprep.subr.bf16.mxu0 0
        %1110 = vmatpush1.bf16.msra.mxu0 0
        %1111 = vmatprep.subr.bf16.mxu0 0
        %1112 = vmatpush1.bf16.msra.mxu0 0
        %1113 = vmatprep.subr.bf16.mxu0 0
        %1114 = vmatpush1.bf16.msra.mxu0 0
        %1115 = vmatprep.subr.bf16.mxu0 0
        %1116 = vmatpush1.bf16.msra.mxu0 0
        %1117 = vmatprep.subr.bf16.mxu0 0
        %1118 = vmatpush1.bf16.msra.mxu0 0
        %1119 = vmatprep.subr.bf16.mxu0 0
        %1120 = vmatpush1.bf16.msra.mxu0 0
        %1121 = vmatprep.subr.bf16.mxu0 0
        %1122 = vmatpush1.bf16.msra.mxu0 0
        %1123 = vmatprep.subr.bf16.mxu0 0
        %1124 = vmatpush1.bf16.msra.mxu0 0
        %1125 = vmatprep.subr.bf16.mxu0 0
        %1126 = vmatpush1.bf16.msra.mxu0 0
        %1127 = vmatprep.subr.bf16.mxu0 0
        %1128 = vmatpush1.bf16.msra.mxu0 0
        %1129 = vmatprep.subr.bf16.mxu0 0
        %1130 = vmatpush1.bf16.msra.mxu0 0
        %1131 = vmatprep.mubr.bf16.mxu0 0
        %1132 = vmatmul.mubr.bf16.gmra.mrb[0].mxu0 %v1094
        %v1133 = vpop.f32.mrb[0].mxu0
        %v1134 = vadd.f32 0.0, %v1133
        %v1135 = vpop.f32.mrb[0].mxu0
        %v1136 = vpop.f32.mrb[0].mxu0
        %v1137 = vpop.f32.mrb[0].mxu0
        %1138 = vdwg.mxu0
        %v1140 = vsel %vm236, %v820, 0
        %v1143 = vsel %vm240, %v821, 0
        %1145 = vmatprep.subr.bf16.mxu0 0
        %1146 = vmatpush1.bf16.msra.mxu0 %v1143
        %1147 = vmatprep.subr.bf16.mxu0 0
        %1148 = vmatpush1.bf16.msra.mxu0 0
        %1149 = vmatprep.subr.bf16.mxu0 0
        %1150 = vmatpush1.bf16.msra.mxu0 0
        %1151 = vmatprep.subr.bf16.mxu0 0
        %1152 = vmatpush1.bf16.msra.mxu0 0
        %1153 = vmatprep.subr.bf16.mxu0 0
        %1154 = vmatpush1.bf16.msra.mxu0 0
        %1155 = vmatprep.subr.bf16.mxu0 0
        %1156 = vmatpush1.bf16.msra.mxu0 0
        %1157 = vmatprep.subr.bf16.mxu0 0
        %1158 = vmatpush1.bf16.msra.mxu0 0
        %1159 = vmatprep.subr.bf16.mxu0 0
        %1160 = vmatpush1.bf16.msra.mxu0 0
        %1161 = vmatprep.subr.bf16.mxu0 0
        %1162 = vmatpush1.bf16.msra.mxu0 0
        %1163 = vmatprep.subr.bf16.mxu0 0
        %1164 = vmatpush1.bf16.msra.mxu0 0
        %1165 = vmatprep.subr.bf16.mxu0 0
        %1166 = vmatpush1.bf16.msra.mxu0 0
        %1167 = vmatprep.subr.bf16.mxu0 0
        %1168 = vmatpush1.bf16.msra.mxu0 0
        %1169 = vmatprep.subr.bf16.mxu0 0
        %1170 = vmatpush1.bf16.msra.mxu0 0
        %1171 = vmatprep.subr.bf16.mxu0 0
        %1172 = vmatpush1.bf16.msra.mxu0 0
        %1173 = vmatprep.subr.bf16.mxu0 0
        %1174 = vmatpush1.bf16.msra.mxu0 0
        %1175 = vmatprep.subr.bf16.mxu0 0
        %1176 = vmatpush1.bf16.msra.mxu0 0
        %1177 = vmatprep.mubr.bf16.mxu0 0
        %1178 = vmatmul.mubr.bf16.gmra.mrb[0].mxu0 %v1140
        %v1179 = vpop.f32.mrb[0].mxu0
        %v1180 = vadd.f32 %v1134, %v1179
        %v1181 = vpop.f32.mrb[0].mxu0
        %v1182 = vpop.f32.mrb[0].mxu0
        %v1183 = vpop.f32.mrb[0].mxu0
        %1184 = vdwg.mxu0
        %v1185 = vld [vmem:[%s3 + $0x50] sm:$0xff]
        %1187 = vset.pattern.permute.xlu0 0
        %1188 = vperm.xlu0 %1187, %v1185
        %v1189 = vpop.permute.xlu0 %1188
        %v1191 = vadd.f32 %v1180, %v1189
        %vm1192 = vcmp.gt.f32.partialorder %v1191, 0.0
        %v1193 = vmul.f32 %v1191, 0.01
        %v1194 = vsel %vm1192, %v1191, %v1193
        %v1195 = vld [vmem:[%s2 + $0x38] sm:$0xf]
        %v1196 = vpack.c.bf16 %v1194, %v1194
        %v1197 = vld [vmem:[%s3 + $0x58] sm:$0xff]
        %1199 = vset.pattern.permute.xlu0 0
        %1200 = vperm.xlu0 %1199, %v1197
        %v1201 = vpop.permute.xlu0 %1200
        %v1204 = vsel %vm236, %v1195, 0
        %v1207 = vsel %vm240, %v1196, 0
        %1209 = vmatprep.subr.bf16.mxu0 0
        %1210 = vmatpush1.bf16.msra.mxu0 %v1207
        %1211 = vmatprep.subr.bf16.mxu0 0
        %1212 = vmatpush1.bf16.msra.mxu0 0
        %1213 = vmatprep.subr.bf16.mxu0 0
        %1214 = vmatpush1.bf16.msra.mxu0 0
        %1215 = vmatprep.subr.bf16.mxu0 0
        %1216 = vmatpush1.bf16.msra.mxu0 0
        %1217 = vmatprep.subr.bf16.mxu0 0
        %1218 = vmatpush1.bf16.msra.mxu0 0
        %1219 = vmatprep.subr.bf16.mxu0 0
        %1220 = vmatpush1.bf16.msra.mxu0 0
        %1221 = vmatprep.subr.bf16.mxu0 0
        %1222 = vmatpush1.bf16.msra.mxu0 0
        %1223 = vmatprep.subr.bf16.mxu0 0
        %1224 = vmatpush1.bf16.msra.mxu0 0
        %1225 = vmatprep.subr.bf16.mxu0 0
        %1226 = vmatpush1.bf16.msra.mxu0 0
        %1227 = vmatprep.subr.bf16.mxu0 0
        %1228 = vmatpush1.bf16.msra.mxu0 0
        %1229 = vmatprep.subr.bf16.mxu0 0
        %1230 = vmatpush1.bf16.msra.mxu0 0
        %1231 = vmatprep.subr.bf16.mxu0 0
        %1232 = vmatpush1.bf16.msra.mxu0 0
        %1233 = vmatprep.subr.bf16.mxu0 0
        %1234 = vmatpush1.bf16.msra.mxu0 0
        %1235 = vmatprep.subr.bf16.mxu0 0
        %1236 = vmatpush1.bf16.msra.mxu0 0
        %1237 = vmatprep.subr.bf16.mxu0 0
        %1238 = vmatpush1.bf16.msra.mxu0 0
        %1239 = vmatprep.subr.bf16.mxu0 0
        %1240 = vmatpush1.bf16.msra.mxu0 0
        %1241 = vmatprep.mubr.bf16.mxu0 0
        %1242 = vmatmul.mubr.bf16.gmra.mrb[0].mxu0 %v1204
        %v1243 = vpop.f32.mrb[0].mxu0
        %v1244 = vadd.f32 %v1201, %v1243
        %v1245 = vpop.f32.mrb[0].mxu0
        %v1246 = vpop.f32.mrb[0].mxu0
        %v1247 = vpop.f32.mrb[0].mxu0
        %1248 = vdwg.mxu0
        %vm1249 = vcmp.gt.f32.partialorder %v1244, 0.0
        %v1250 = vmul.f32 %v1244, 0.01
        %v1251 = vsel %vm1249, %v1244, %v1250
        %vm1252 = vcmask 523264
        %1253 = vst.msk [vmem:[%s203] sm:$0xff] %vm1252, %v1251
        %s1254 = sand.u32 %s120, 1
        %s1255 = scalar_lea.sflag [#allocation3], %s1254
        %s1256 = sand.u32 %s120, 1
        %s1257 = smul.addr %s1256, 8
        %s1258 = scalar_lea.vmem [#allocation2], %s1257
        // Predicated region
        $region37: #{tpu_custom_call.1} parent=35 // pred_check
          %p1259 = pneg %p130
        $region38: #{tpu_custom_call.1} parent=35 // pred_check_branch
          %1261 = sbr.rel (%p1259) target = $region40
        $region39: #{tpu_custom_call.1} parent=35 // pred_region
          %s1263 = ssub.s32 128, 128
          %1264 = vsyncadd %s1255, %s1263
          %s1265 = smul.addr %s18, 128
          %s1266 = scalar_lea.hbm %s4, %s1265
          %s1268 = sshll.u32 %s1258, 4
          %s1269 = int_to_ptr.vmem [resolvable:$true] %s1268
          %1271 = dma.vmem_to_hbm [thread:$0]  %s1269, 128, %s1266, %s1255
        $region40: #{tpu_custom_call.1} parent=35 // pred_fallthru
          _
      $region36: #{tpu_custom_call.1} parent=5 // pred_fallthru
        _
      %p1272 = scmp.le.s32.totalorder 2, %s13
      // Predicated region
      $region41: #{tpu_custom_call.1} parent=5 // pred_check
        %p1273 = pneg %p1272
      $region42: #{tpu_custom_call.1} parent=5 // pred_check_branch
        %1275 = sbr.rel (%p1273) target = $region44
      $region43: #{tpu_custom_call.1} parent=5 // pred_region
        %s1276 = ssub.s32 %s13, 2
        // Predicated region
        $region45: #{tpu_custom_call.1} parent=43 // pred_check
          %p1277 = pneg %p136
        $region46: #{tpu_custom_call.1} parent=43 // pred_check_branch
          %1279 = sbr.rel (%p1277) target = $region48
        $region47: #{tpu_custom_call.1} parent=43 // pred_region
          %s1280 = sand.u32 %s121, 1
          %s1281 = scalar_lea.sflag [#allocation3], %s1280
          %s1282 = sand.u32 %s121, 1
          %s1283 = smul.addr %s1282, 8
          %s1284 = scalar_lea.vmem [#allocation2], %s1283
          %1285 = dma.done %s1281, 128
        $region48: #{tpu_custom_call.1} parent=43 // pred_fallthru
          _
      $region44: #{tpu_custom_call.1} parent=5 // pred_fallthru
        _
    $region6: #{tpu_custom_call.1} parent=1 // loop_footer
      %s17 = sadd.s32 1, %s13
    $region7: #{tpu_custom_call.1} parent=1 // loop_footer_branch
      %12 = sbr.rel target = $region3
    $region8: #{tpu_custom_call.1} parent=1 // loop_exit
      _
    %1286 = vsyncpa [#allocation3], 1
    %s1287 = scalar_lea.sflag [#allocation3], 1
    %1288 = vsyncpa %s1287, 1

</llo_original>
